<compile_context>
chip_gen: v5e
topology: v5e:2x2
jax: 0.10.0
libtpu: 0.0.40
codegen_flags: <defaults>
</compile_context>

<pallas_src>
import numpy as np
import jax
import jax.numpy as jnp
from jax.experimental import pallas as pl
from jax.experimental.pallas import tpu as pltpu

# ---------------- Fbank configuration (compile-time constants) ----------------
SAMP_FREQ   = 16000.0
FRAME_LEN   = 400                    # 25 ms
FRAME_SHIFT = 160                    # 10 ms
PADDED_WIN  = 512                    # round_to_power_of_two
NFREQ       = PADDED_WIN // 2 + 1    # 257 rfft bins
NFREQ_PAD   = 256                    # Nyquist bin has zero mel weight -> dropped exactly
NMEL        = 80
NMEL_PAD    = 128                    # pad mel axis to lane width
PREEMPH     = 0.97
EPS         = 1.1920929e-07          # float32 epsilon (Kaldi log floor)
MAX_TNF     = 512                    # frames per grid step (raised per perf review)


def _mel_scale(f):
    return 1127.0 * np.log(1.0 + f / 700.0)


def kaldi_mel_banks(num_bins, padded_window, samp_freq, low_freq=20.0, high_freq=0.0):
    nyquist = 0.5 * samp_freq
    if high_freq <= 0.0:
        high_freq = nyquist + high_freq
    num_fft_bins = padded_window // 2
    fft_bin_width = samp_freq / padded_window
    mel_low, mel_high = _mel_scale(low_freq), _mel_scale(high_freq)
    mel_delta = (mel_high - mel_low) / (num_bins + 1)
    banks = np.zeros((num_bins, padded_window // 2 + 1), dtype=np.float32)
    mels = _mel_scale(fft_bin_width * np.arange(num_fft_bins))
    for j in range(num_bins):
        left = mel_low + j * mel_delta
        center = left + mel_delta
        right = center + mel_delta
        up = (mels - left) / (center - left)
        down = (right - mels) / (right - center)
        w = np.where(mels <= center, up, down)
        w = np.where((mels > left) & (mels < right), w, 0.0)
        banks[j, :num_fft_bins] = w
    return banks


def povey_window(frame_len):
    n = np.arange(frame_len)
    return (0.5 - 0.5 * np.cos(2.0 * np.pi * n / (frame_len - 1))) ** 0.85


# -------------------- offline-folded constant matrices (float64) --------------------
def _fold_linear_preproc_into_dft():
    """[FRAME_LEN, 2*NFREQ_PAD] matrix M such that frames @ M == [Re | Im] of the rDFT
    of the DC-removed, pre-emphasised, Povey-windowed, zero-padded frame."""
    n = FRAME_LEN
    dc = np.eye(n) - 1.0 / n                                   # remove DC offset
    pre = np.eye(n) - PREEMPH * np.eye(n, k=1)                 # row convention: p = d @ pre
    pre[0, 0] = 1.0 - PREEMPH                                  # x[0] -= 0.97 * x[0]
    win = np.diag(povey_window(n))
    nn = np.arange(n, dtype=np.float64)[:, None]
    kk = np.arange(NFREQ_PAD, dtype=np.float64)[None, :]
    ang = 2.0 * np.pi * nn * kk / PADDED_WIN
    dft = np.concatenate([np.cos(ang), np.sin(ang)], axis=1)   # [400, 512]
    return (dc @ pre @ win @ dft).astype(np.float32)


def _mel_matrix():
    banks = kaldi_mel_banks(NMEL, PADDED_WIN, SAMP_FREQ)       # [80, 257]
    # Dropping frequency columns >= NFREQ_PAD is exact only because their weight is 0.
    assert np.all(banks[:, NFREQ_PAD:] == 0.0)
    m = np.zeros((NFREQ_PAD, NMEL_PAD), np.float32)
    m[:, :NMEL] = banks[:, :NFREQ_PAD].T
    return m


def _split_hi_lo_bf16(m32):
    """Exact hi/lo bf16 decomposition of an f32 matrix (hi + lo ~= m32 to ~16 bits)."""
    hi = m32.astype(jnp.bfloat16)
    lo = (m32 - hi.astype(jnp.float32)).astype(jnp.bfloat16)
    return hi, lo


_W32 = jnp.asarray(_fold_linear_preproc_into_dft(), dtype=jnp.float32)   # [400, 512]
_DFT_HI, _DFT_LO = _split_hi_lo_bf16(_W32)                               # bf16 [400, 512] x2
_MEL_BF16 = jnp.asarray(_mel_matrix(), dtype=jnp.bfloat16)               # [256, 128]


# ------------------------------- Pallas kernel --------------------------------
def fbank_kernel(frames_ref, dft_hi_ref, dft_lo_ref, mel_ref, out_ref):
    x = frames_ref[...]                                        # [TNF, FRAME_LEN] f32
    # in-kernel hi/lo bf16 split of the frame tile (cheap VPU work)
    x_hi = x.astype(jnp.bfloat16)
    x_lo = (x - x_hi.astype(jnp.float32)).astype(jnp.bfloat16)
    w_hi = dft_hi_ref[...]                                     # bf16 [400, 512]
    w_lo = dft_lo_ref[...]
    # folded (DC + preemph + window + rDFT) as 3 bf16 MXU dots, f32 accumulation
    y = jnp.dot(x_hi, w_hi, preferred_element_type=jnp.float32)        # [TNF, 512]
    y = y + jnp.dot(x_lo, w_hi, preferred_element_type=jnp.float32)
    y = y + jnp.dot(x_hi, w_lo, preferred_element_type=jnp.float32)
    re = y[:, :NFREQ_PAD]                                      # lane-aligned slices (free)
    im = y[:, NFREQ_PAD:]
    power = re * re + im * im                                  # [TNF, NFREQ_PAD] f32
    # mel filterbank in plain bf16 (positive sums -> bounded relative error) + log floor
    mel = jnp.dot(power.astype(jnp.bfloat16), mel_ref[...],
                  preferred_element_type=jnp.float32)          # [TNF, NMEL_PAD]
    out_ref[...] = jnp.log(jnp.maximum(mel, EPS))


# --------------------------------- wrapper ------------------------------------
def _num_tensorcores():
    # Generation heuristic: v7x has 2 TensorCores per chip; v5e/v6e have 1.
    try:
        kind = jax.devices()[0].device_kind.lower()
    except Exception:
        return 1
    return 2 if "v7" in kind else 1


def _choose_tnf(nf, num_cores):
    tnf = MAX_TNF
    # Don't pad tiny inputs up to a huge tile.
    while tnf > 8 and tnf // 2 >= nf:
        tnf //= 2
    # Only on multi-TensorCore chips (v7x): keep >= num_cores grid steps so the
    # parallel grid axis can shard across cores.  On v5e/v6e one big step is best.
    if num_cores > 1:
        while tnf > 8 and pl.cdiv(nf, tnf) < num_cores:
            tnf //= 2
    return tnf


def fbank(waves, trim_mel_pad=True):
    B, T = waves.shape
    num_frames = 1 + (T - FRAME_LEN) // FRAME_SHIFT            # snip_edges=True
    gather_idx = (FRAME_SHIFT * np.arange(num_frames))[:, None] + np.arange(FRAME_LEN)[None, :]
    frames = waves[:, gather_idx].astype(jnp.float32)          # [B, NF, FRAME_LEN]
    nf = B * num_frames
    tnf = _choose_tnf(nf, _num_tensorcores())
    nf_pad = pl.cdiv(nf, tnf) * tnf
    frames = frames.reshape(nf, FRAME_LEN)                     # K stays 400 in HBM
    if nf_pad != nf:
        frames = jnp.pad(frames, ((0, nf_pad - nf), (0, 0)))

    flops = nf_pad * (3 * 2 * FRAME_LEN * (2 * NFREQ_PAD) + 2 * NFREQ_PAD * NMEL_PAD)
    transcendentals = nf_pad * NMEL_PAD
    bytes_accessed = (nf_pad * FRAME_LEN * 4                   # frames in (f32)
                      + nf_pad * NMEL_PAD * 4                  # log-mel out (f32)
                      + 2 * FRAME_LEN * (2 * NFREQ_PAD) * 2    # W_hi + W_lo (bf16)
                      + NFREQ_PAD * NMEL_PAD * 2)              # mel matrix (bf16)

    out = pl.pallas_call(
        fbank_kernel,
        out_shape=jax.ShapeDtypeStruct((nf_pad, NMEL_PAD), jnp.float32),
        grid_spec=pltpu.PrefetchScalarGridSpec(
            num_scalar_prefetch=0,
            grid=(nf_pad // tnf,),
            in_specs=[
                pl.BlockSpec((tnf, FRAME_LEN), lambda i: (i, 0)),
                pl.BlockSpec((FRAME_LEN, 2 * NFREQ_PAD), lambda i: (0, 0)),
                pl.BlockSpec((FRAME_LEN, 2 * NFREQ_PAD), lambda i: (0, 0)),
                pl.BlockSpec((NFREQ_PAD, NMEL_PAD), lambda i: (0, 0)),
            ],
            out_specs=pl.BlockSpec((tnf, NMEL_PAD), lambda i: (i, 0)),
        ),
        compiler_params=pltpu.CompilerParams(dimension_semantics=("parallel",)),
        cost_estimate=pl.CostEstimate(flops=flops,
                                      transcendentals=transcendentals,
                                      bytes_accessed=bytes_accessed),
    )(frames, _DFT_HI, _DFT_LO, _MEL_BF16)

    if not trim_mel_pad:
        # lane-dense output for downstream consumers that accept 128 padded mel bins
        # (columns 80..127 hold log(EPS) garbage)
        return out[:nf].reshape(B, num_frames, NMEL_PAD)
    # padded rows / padded mel columns hold log(EPS) garbage; slice them off
    return out[:nf, :NMEL].reshape(B, num_frames, NMEL)


# ----------------------------- pure-numpy reference ---------------------------
def fbank_ref(waves_np):
    B, T = waves_np.shape
    nf = 1 + (T - FRAME_LEN) // FRAME_SHIFT
    idx = (FRAME_SHIFT * np.arange(nf))[:, None] + np.arange(FRAME_LEN)[None, :]
    frames = waves_np[:, idx].astype(np.float64)
    frames = frames - frames.mean(axis=-1, keepdims=True)
    prev = np.concatenate([frames[..., :1], frames[..., :-1]], axis=-1)
    frames = frames - PREEMPH * prev
    frames = frames * povey_window(FRAME_LEN)[None, None, :]
    spec = np.fft.rfft(frames, n=PADDED_WIN, axis=-1)
    power = np.abs(spec) ** 2
    mel = power @ kaldi_mel_banks(NMEL, PADDED_WIN, SAMP_FREQ).T.astype(np.float64)
    return np.log(np.maximum(mel, EPS))


if __name__ == "__main__":
    key = jax.random.PRNGKey(0)
    B = 2
    T = FRAME_LEN + 31 * FRAME_SHIFT            # -> 32 frames per utterance (small)
    waves = jax.random.normal(key, (B, T), dtype=jnp.float32) * 32768.0
    out = jax.block_until_ready(fbank(waves))
    ref = fbank_ref(np.asarray(waves))
    np.testing.assert_allclose(np.asarray(out), ref, rtol=5e-3, atol=5e-3)
    print("KERNEL_OK")
</pallas_src>

<mosaic_0001>
module attributes {stable_mosaic.version = 11 : i64} {
  func.func @fbank_kernel(%arg0: i32, %arg1: memref<64x400xf32, #tpu.memory_space<vmem>>, %arg2: memref<400x512xbf16, #tpu.memory_space<vmem>>, %arg3: memref<400x512xbf16, #tpu.memory_space<vmem>>, %arg4: memref<256x128xbf16, #tpu.memory_space<vmem>>, %arg5: memref<64x128xf32, #tpu.memory_space<vmem>>) attributes {dimension_semantics = [#tpu.dimension_semantics<parallel>], iteration_bounds = array<i64: 1>, scalar_prefetch = 0 : i64, scratch_operands = 0 : i64, tpu.core_type = #tpu.core_type<tc>, window_params = [{transform_indices = @transform_0, window_bounds = array<i64: 64, 400>}, {pipeline_mode = #tpu.pipeline_mode<synchronous>, transform_indices = @transform_1, window_bounds = array<i64: 400, 512>}, {pipeline_mode = #tpu.pipeline_mode<synchronous>, transform_indices = @transform_2, window_bounds = array<i64: 400, 512>}, {pipeline_mode = #tpu.pipeline_mode<synchronous>, transform_indices = @transform_3, window_bounds = array<i64: 256, 128>}, {transform_indices = @transform_4, window_bounds = array<i64: 64, 128>}]} {
    %c0 = arith.constant 0 : index
    %c0_0 = arith.constant 0 : index
    %0 = vector.load %arg1[%c0, %c0_0] : memref<64x400xf32, #tpu.memory_space<vmem>>, vector<64x400xf32>
    %1 = arith.truncf %0 : vector<64x400xf32> to vector<64x400xbf16>
    %2 = arith.extf %1 : vector<64x400xbf16> to vector<64x400xf32>
    %3 = arith.subf %0, %2 : vector<64x400xf32>
    %4 = arith.truncf %3 : vector<64x400xf32> to vector<64x400xbf16>
    %c0_1 = arith.constant 0 : index
    %c0_2 = arith.constant 0 : index
    %5 = vector.load %arg2[%c0_1, %c0_2] : memref<400x512xbf16, #tpu.memory_space<vmem>>, vector<400x512xbf16>
    %c0_3 = arith.constant 0 : index
    %c0_4 = arith.constant 0 : index
    %6 = vector.load %arg3[%c0_3, %c0_4] : memref<400x512xbf16, #tpu.memory_space<vmem>>, vector<400x512xbf16>
    %cst = arith.constant dense<0.000000e+00> : vector<64x512xf32>
    %7 = tpu.matmul %1, %5, %cst {dimension_numbers = #tpu.dot_dimension_numbers<[1], [0], [0], [1], [0, 0, 1, 1], [], []>} : vector<64x400xbf16>, vector<400x512xbf16>, vector<64x512xf32> -> vector<64x512xf32>
    %cst_5 = arith.constant dense<0.000000e+00> : vector<64x512xf32>
    %8 = tpu.matmul %4, %5, %cst_5 {dimension_numbers = #tpu.dot_dimension_numbers<[1], [0], [0], [1], [0, 0, 1, 1], [], []>} : vector<64x400xbf16>, vector<400x512xbf16>, vector<64x512xf32> -> vector<64x512xf32>
    %9 = arith.addf %7, %8 : vector<64x512xf32>
    %cst_6 = arith.constant dense<0.000000e+00> : vector<64x512xf32>
    %10 = tpu.matmul %1, %6, %cst_6 {dimension_numbers = #tpu.dot_dimension_numbers<[1], [0], [0], [1], [0, 0, 1, 1], [], []>} : vector<64x400xbf16>, vector<400x512xbf16>, vector<64x512xf32> -> vector<64x512xf32>
    %11 = arith.addf %9, %10 : vector<64x512xf32>
    %12 = vector.extract_strided_slice %11 {offsets = [0, 0], sizes = [64, 256], strides = [1, 1]} : vector<64x512xf32> to vector<64x256xf32>
    %13 = vector.extract_strided_slice %11 {offsets = [0, 256], sizes = [64, 256], strides = [1, 1]} : vector<64x512xf32> to vector<64x256xf32>
    %14 = arith.mulf %12, %12 : vector<64x256xf32>
    %15 = arith.mulf %13, %13 : vector<64x256xf32>
    %16 = arith.addf %14, %15 : vector<64x256xf32>
    %17 = arith.truncf %16 : vector<64x256xf32> to vector<64x256xbf16>
    %c0_7 = arith.constant 0 : index
    %c0_8 = arith.constant 0 : index
    %18 = vector.load %arg4[%c0_7, %c0_8] : memref<256x128xbf16, #tpu.memory_space<vmem>>, vector<256x128xbf16>
    %cst_9 = arith.constant dense<0.000000e+00> : vector<64x128xf32>
    %19 = tpu.matmul %17, %18, %cst_9 {dimension_numbers = #tpu.dot_dimension_numbers<[1], [0], [0], [1], [0, 0, 1, 1], [], []>} : vector<64x256xbf16>, vector<256x128xbf16>, vector<64x128xf32> -> vector<64x128xf32>
    %cst_10 = arith.constant 1.1920929E-7 : f32
    %20 = vector.broadcast %cst_10 : f32 to vector<64x128xf32>
    %21 = arith.maximumf %19, %20 : vector<64x128xf32>
    %22 = math.log %21 : vector<64x128xf32>
    %c0_11 = arith.constant 0 : index
    %c0_12 = arith.constant 0 : index
    %23 = vector.load %arg5[%c0_11, %c0_12] : memref<64x128xf32, #tpu.memory_space<vmem>>, vector<64x128xf32>
    tpu.vector_store %arg5[%c0_11, %c0_12], %22 {strides = array<i32>} : memref<64x128xf32, #tpu.memory_space<vmem>>, vector<64x128xf32>,
    return
  }
  func.func @transform_0(%arg0: i32) -> (i32, i32) {
    %c0_i32 = arith.constant 0 : i32
    %c0_i32_0 = arith.constant 0 : i32
    return %arg0, %c0_i32 : i32, i32
  }
  func.func @transform_1(%arg0: i32) -> (i32, i32) {
    %c0_i32 = arith.constant 0 : i32
    %c0_i32_0 = arith.constant 0 : i32
    %c0_i32_1 = arith.constant 0 : i32
    return %c0_i32, %c0_i32_0 : i32, i32
  }
  func.func @transform_2(%arg0: i32) -> (i32, i32) {
    %c0_i32 = arith.constant 0 : i32
    %c0_i32_0 = arith.constant 0 : i32
    %c0_i32_1 = arith.constant 0 : i32
    return %c0_i32, %c0_i32_0 : i32, i32
  }
  func.func @transform_3(%arg0: i32) -> (i32, i32) {
    %c0_i32 = arith.constant 0 : i32
    %c0_i32_0 = arith.constant 0 : i32
    %c0_i32_1 = arith.constant 0 : i32
    return %c0_i32, %c0_i32_0 : i32, i32
  }
  func.func @transform_4(%arg0: i32) -> (i32, i32) {
    %c0_i32 = arith.constant 0 : i32
    %c0_i32_0 = arith.constant 0 : i32
    return %arg0, %c0_i32 : i32, i32
  }
}

</mosaic_0001>

<llo_original>
// kernel: tpu_custom_call.1
$region0: #{tpu_custom_call.1}
  #allocation0 [shape = 'u32[]', space=smem, size = 0x4, offset = 0x4, fixed_abs, tag = 'smem constant byte address 0x4 - core index']
  #allocation1 [shape = 'u32[72,128]{1,0:T(1,128)}', space=vmem, size = 0x9000, scoped, tag = 'internal scratch']
  %s0 = inlined_call_operand.hbm [shape: f32[64,400], index: 0, kind: input, shape index: {}]
  %s1 = inlined_call_operand.hbm [shape: bf16[400,512], index: 1, kind: input, shape index: {}]
  %s2 = inlined_call_operand.hbm [shape: bf16[400,512], index: 2, kind: input, shape index: {}]
  %s3 = inlined_call_operand.hbm [shape: bf16[256,128], index: 3, kind: input, shape index: {}]
  %s4 = inlined_call_operand.hbm [shape: f32[64,128], index: 4, kind: output, shape index: {}]
  %s5 = sld [smem:[#allocation0]]
  $region42: #{tpu_custom_call.1} parent=0
    _
  %s7 = ssub.s32 1, %s5
  %s8 = scalar_select 0, %s7, %s5
  $region1: #{tpu_custom_call.1} parent=0
    #allocation2 [shape = 'u8[131072]{0}', space=vmem, size = 0x20000, scoped, tag = 'input window, operand 0, single buffered']
    #allocation3 [shape = 's32[1]{0}', space=sflag, size = 0x4, scoped, tag = 'scoped memory for tpu_custom_call.1']
    #allocation4 [shape = 's32[1]{0}', space=sflag, size = 0x4, scoped, tag = 'scoped memory for tpu_custom_call.1']
    #allocation5 [shape = 'u8[409600]{0}', space=vmem, size = 0x64000, scoped, tag = 'input window, operand 1, single buffered']
    #allocation6 [shape = 's32[1]{0}', space=sflag, size = 0x4, scoped, tag = 'scoped memory for tpu_custom_call.1']
    #allocation7 [shape = 'u8[409600]{0}', space=vmem, size = 0x64000, scoped, tag = 'input window, operand 2, single buffered']
    #allocation8 [shape = 'u8[65536]{0}', space=vmem, size = 0x10000, scoped, tag = 'input window, operand 3, single buffered']
    #allocation9 [shape = 's32[1]{0}', space=sflag, size = 0x4, scoped, tag = 'scoped memory for tpu_custom_call.1']
    #allocation10 [shape = 'u8[32768]{0}', space=vmem, size = 0x8000, scoped, tag = 'output window, operand 0, single buffered']
    %9 = vsyncpa [#allocation3], 0
    %10 = vsyncpa [#allocation6], 0
    %11 = vsyncpa [#allocation9], 0
    %12 = vsyncpa [#allocation4], 0
    // Predicated region
    $region2: #{tpu_custom_call.1} parent=1 // pred_check
      _
    $region3: #{tpu_custom_call.1} parent=1 // pred_check_branch
      %14 = sbr.rel (0) target = $region5
    $region4: #{tpu_custom_call.1} parent=1 // pred_region
      %16 = vsyncadd [#allocation3], 0
      %s17 = sshll.u32 %s0, 4
      %s18 = int_to_ptr.hbm [resolvable:$true] %s17
      %s19 = sshll.u32 [#allocation2], 4
      %s20 = int_to_ptr.vmem [resolvable:$true] %s19
      %25 = dma.hbm_to_vmem [thread:$0]  %s18, 4096, %s20, [#allocation3], 512, 512, 32
    $region5: #{tpu_custom_call.1} parent=1 // pred_fallthru
      _
    // Predicated region
    $region6: #{tpu_custom_call.1} parent=1 // pred_check
      _
    $region7: #{tpu_custom_call.1} parent=1 // pred_check_branch
      %27 = sbr.rel (0) target = $region9
    $region8: #{tpu_custom_call.1} parent=1 // pred_region
      %29 = vsyncadd [#allocation6], 0
      %s30 = sshll.u32 %s1, 4
      %s31 = int_to_ptr.hbm [resolvable:$true] %s30
      %s32 = sshll.u32 [#allocation5], 4
      %s33 = int_to_ptr.vmem [resolvable:$true] %s32
      %38 = dma.hbm_to_vmem [thread:$0]  %s31, 12800, %s33, [#allocation6], 256, 256, 16
    $region9: #{tpu_custom_call.1} parent=1 // pred_fallthru
      _
    // Predicated region
    $region10: #{tpu_custom_call.1} parent=1 // pred_check
      _
    $region11: #{tpu_custom_call.1} parent=1 // pred_check_branch
      %40 = sbr.rel (0) target = $region13
    $region12: #{tpu_custom_call.1} parent=1 // pred_region
      %42 = vsyncadd [#allocation6], 0
      %s43 = sshll.u32 %s2, 4
      %s44 = int_to_ptr.hbm [resolvable:$true] %s43
      %s45 = sshll.u32 [#allocation7], 4
      %s46 = int_to_ptr.vmem [resolvable:$true] %s45
      %51 = dma.hbm_to_vmem [thread:$0]  %s44, 12800, %s46, [#allocation6], 256, 256, 16
    $region13: #{tpu_custom_call.1} parent=1 // pred_fallthru
      _
    // Predicated region
    $region14: #{tpu_custom_call.1} parent=1 // pred_check
      _
    $region15: #{tpu_custom_call.1} parent=1 // pred_check_branch
      %53 = sbr.rel (0) target = $region17
    $region16: #{tpu_custom_call.1} parent=1 // pred_region
      %55 = vsyncadd [#allocation9], 0
      %s56 = sshll.u32 %s3, 4
      %s57 = int_to_ptr.hbm [resolvable:$true] %s56
      %s58 = sshll.u32 [#allocation8], 4
      %s59 = int_to_ptr.vmem [resolvable:$true] %s58
      %64 = dma.hbm_to_vmem [thread:$0]  %s57, 2048, %s59, [#allocation9], 64, 64, 4
    $region17: #{tpu_custom_call.1} parent=1 // pred_fallthru
      _
    // Predicated region
    $region18: #{tpu_custom_call.1} parent=1 // pred_check
      _
    $region19: #{tpu_custom_call.1} parent=1 // pred_check_branch
      %66 = sbr.rel (0) target = $region21
    $region20: #{tpu_custom_call.1} parent=1 // pred_region
      %68 = dma.done [#allocation3], 4096
    $region21: #{tpu_custom_call.1} parent=1 // pred_fallthru
      _
    // Predicated region
    $region22: #{tpu_custom_call.1} parent=1 // pred_check
      _
    $region23: #{tpu_custom_call.1} parent=1 // pred_check_branch
      %70 = sbr.rel (0) target = $region25
    $region24: #{tpu_custom_call.1} parent=1 // pred_region
      %72 = dma.done [#allocation6], 12800
    $region25: #{tpu_custom_call.1} parent=1 // pred_fallthru
      _
    // Predicated region
    $region26: #{tpu_custom_call.1} parent=1 // pred_check
      _
    $region27: #{tpu_custom_call.1} parent=1 // pred_check_branch
      %74 = sbr.rel (0) target = $region29
    $region28: #{tpu_custom_call.1} parent=1 // pred_region
      %76 = dma.done [#allocation6], 12800
    $region29: #{tpu_custom_call.1} parent=1 // pred_fallthru
      _
    // Predicated region
    $region30: #{tpu_custom_call.1} parent=1 // pred_check
      _
    $region31: #{tpu_custom_call.1} parent=1 // pred_check_branch
      %78 = sbr.rel (0) target = $region33
    $region32: #{tpu_custom_call.1} parent=1 // pred_region
      %80 = dma.done [#allocation9], 2048
    $region33: #{tpu_custom_call.1} parent=1 // pred_fallthru
      _
    %v82 = vld [vmem:[#allocation2] sm:$0xff]
    %v83 = vld [vmem:[#allocation2 + $0x8] sm:$0xff]
    %v84 = vld [vmem:[#allocation2 + $0x10] sm:$0xff]
    %v85 = vld [vmem:[#allocation2 + $0x18] sm:$0xff]
    %v86 = vld [vmem:[#allocation2 + $0x20] sm:$0xff]
    %v87 = vld [vmem:[#allocation2 + $0x28] sm:$0xff]
    %v88 = vld [vmem:[#allocation2 + $0x30] sm:$0xff]
    %v89 = vld [vmem:[#allocation2 + $0x38] sm:$0xff]
    %v90 = vld [vmem:[#allocation2 + $0x40] sm:$0xff]
    %v91 = vld [vmem:[#allocation2 + $0x48] sm:$0xff]
    %v92 = vld [vmem:[#allocation2 + $0x50] sm:$0xff]
    %v93 = vld [vmem:[#allocation2 + $0x58] sm:$0xff]
    %v94 = vld [vmem:[#allocation2 + $0x60] sm:$0xff]
    %v95 = vld [vmem:[#allocation2 + $0x68] sm:$0xff]
    %v96 = vld [vmem:[#allocation2 + $0x70] sm:$0xff]
    %v97 = vld [vmem:[#allocation2 + $0x78] sm:$0xff]
    %v98 = vld [vmem:[#allocation2 + $0x80] sm:$0xff]
    %v99 = vld [vmem:[#allocation2 + $0x88] sm:$0xff]
    %v100 = vld [vmem:[#allocation2 + $0x90] sm:$0xff]
    %v101 = vld [vmem:[#allocation2 + $0x98] sm:$0xff]
    %v102 = vld [vmem:[#allocation2 + $0xa0] sm:$0xff]
    %v103 = vld [vmem:[#allocation2 + $0xa8] sm:$0xff]
    %v104 = vld [vmem:[#allocation2 + $0xb0] sm:$0xff]
    %v105 = vld [vmem:[#allocation2 + $0xb8] sm:$0xff]
    %v106 = vld [vmem:[#allocation2 + $0xc0] sm:$0xff]
    %v107 = vld [vmem:[#allocation2 + $0xc8] sm:$0xff]
    %v108 = vld [vmem:[#allocation2 + $0xd0] sm:$0xff]
    %v109 = vld [vmem:[#allocation2 + $0xd8] sm:$0xff]
    %v110 = vld [vmem:[#allocation2 + $0xe0] sm:$0xff]
    %v111 = vld [vmem:[#allocation2 + $0xe8] sm:$0xff]
    %v112 = vld [vmem:[#allocation2 + $0xf0] sm:$0xff]
    %v113 = vld [vmem:[#allocation2 + $0xf8] sm:$0xff]
    %v114 = vpack.c.bf16 %v83, %v82
    %v115 = vpack.c.bf16 %v85, %v84
    %v116 = vpack.c.bf16 %v87, %v86
    %v117 = vpack.c.bf16 %v89, %v88
    %v118 = vpack.c.bf16 %v91, %v90
    %v119 = vpack.c.bf16 %v93, %v92
    %v120 = vpack.c.bf16 %v95, %v94
    %v121 = vpack.c.bf16 %v97, %v96
    %v122 = vpack.c.bf16 %v99, %v98
    %v123 = vpack.c.bf16 %v101, %v100
    %v124 = vpack.c.bf16 %v103, %v102
    %v125 = vpack.c.bf16 %v105, %v104
    %v126 = vpack.c.bf16 %v107, %v106
    %v127 = vpack.c.bf16 %v109, %v108
    %v128 = vpack.c.bf16 %v111, %v110
    %v129 = vpack.c.bf16 %v113, %v112
    %v130 = vunpack.c.l.bf16 %v114
    %v131 = vunpack.c.h.bf16 %v114
    %v132 = vunpack.c.l.bf16 %v115
    %v133 = vunpack.c.h.bf16 %v115
    %v134 = vunpack.c.l.bf16 %v116
    %v135 = vunpack.c.h.bf16 %v116
    %v136 = vunpack.c.l.bf16 %v117
    %v137 = vunpack.c.h.bf16 %v117
    %v138 = vunpack.c.l.bf16 %v118
    %v139 = vunpack.c.h.bf16 %v118
    %v140 = vunpack.c.l.bf16 %v119
    %v141 = vunpack.c.h.bf16 %v119
    %v142 = vunpack.c.l.bf16 %v120
    %v143 = vunpack.c.h.bf16 %v120
    %v144 = vunpack.c.l.bf16 %v121
    %v145 = vunpack.c.h.bf16 %v121
    %v146 = vunpack.c.l.bf16 %v122
    %v147 = vunpack.c.h.bf16 %v122
    %v148 = vunpack.c.l.bf16 %v123
    %v149 = vunpack.c.h.bf16 %v123
    %v150 = vunpack.c.l.bf16 %v124
    %v151 = vunpack.c.h.bf16 %v124
    %v152 = vunpack.c.l.bf16 %v125
    %v153 = vunpack.c.h.bf16 %v125
    %v154 = vunpack.c.l.bf16 %v126
    %v155 = vunpack.c.h.bf16 %v126
    %v156 = vunpack.c.l.bf16 %v127
    %v157 = vunpack.c.h.bf16 %v127
    %v158 = vunpack.c.l.bf16 %v128
    %v159 = vunpack.c.h.bf16 %v128
    %v160 = vunpack.c.l.bf16 %v129
    %v161 = vunpack.c.h.bf16 %v129
    %v162 = vsub.f32 %v82, %v130
    %v163 = vsub.f32 %v83, %v131
    %v164 = vsub.f32 %v84, %v132
    %v165 = vsub.f32 %v85, %v133
    %v166 = vsub.f32 %v86, %v134
    %v167 = vsub.f32 %v87, %v135
    %v168 = vsub.f32 %v88, %v136
    %v169 = vsub.f32 %v89, %v137
    %v170 = vsub.f32 %v90, %v138
    %v171 = vsub.f32 %v91, %v139
    %v172 = vsub.f32 %v92, %v140
    %v173 = vsub.f32 %v93, %v141
    %v174 = vsub.f32 %v94, %v142
    %v175 = vsub.f32 %v95, %v143
    %v176 = vsub.f32 %v96, %v144
    %v177 = vsub.f32 %v97, %v145
    %v178 = vsub.f32 %v98, %v146
    %v179 = vsub.f32 %v99, %v147
    %v180 = vsub.f32 %v100, %v148
    %v181 = vsub.f32 %v101, %v149
    %v182 = vsub.f32 %v102, %v150
    %v183 = vsub.f32 %v103, %v151
    %v184 = vsub.f32 %v104, %v152
    %v185 = vsub.f32 %v105, %v153
    %v186 = vsub.f32 %v106, %v154
    %v187 = vsub.f32 %v107, %v155
    %v188 = vsub.f32 %v108, %v156
    %v189 = vsub.f32 %v109, %v157
    %v190 = vsub.f32 %v110, %v158
    %v191 = vsub.f32 %v111, %v159
    %v192 = vsub.f32 %v112, %v160
    %v193 = vsub.f32 %v113, %v161
    %v194 = vpack.c.bf16 %v166, %v162
    %v195 = vpack.c.bf16 %v167, %v163
    %v196 = vpack.c.bf16 %v168, %v164
    %v197 = vpack.c.bf16 %v169, %v165
    %v198 = vpack.c.bf16 %v174, %v170
    %v199 = vpack.c.bf16 %v175, %v171
    %v200 = vpack.c.bf16 %v176, %v172
    %v201 = vpack.c.bf16 %v177, %v173
    %v202 = vpack.c.bf16 %v182, %v178
    %v203 = vpack.c.bf16 %v183, %v179
    %v204 = vpack.c.bf16 %v184, %v180
    %v205 = vpack.c.bf16 %v185, %v181
    %v206 = vpack.c.bf16 %v190, %v186
    %v207 = vpack.c.bf16 %v191, %v187
    %v208 = vpack.c.bf16 %v192, %v188
    %v209 = vpack.c.bf16 %v193, %v189
    %v210 = vld [vmem:[#allocation5] sm:$0xff]
    %v211 = vld [vmem:[#allocation5 + $0x8] sm:$0xff]
    %v212 = vld [vmem:[#allocation5 + $0x10] sm:$0xff]
    %v213 = vld [vmem:[#allocation5 + $0x18] sm:$0xff]
    %v214 = vld [vmem:[#allocation5 + $0x20] sm:$0xff]
    %v215 = vld [vmem:[#allocation5 + $0x28] sm:$0xff]
    %v216 = vld [vmem:[#allocation5 + $0x30] sm:$0xff]
    %v217 = vld [vmem:[#allocation5 + $0x38] sm:$0xff]
    %v218 = vld [vmem:[#allocation5 + $0x40] sm:$0xff]
    %v219 = vld [vmem:[#allocation5 + $0x48] sm:$0xff]
    %v220 = vld [vmem:[#allocation5 + $0x50] sm:$0xff]
    %v221 = vld [vmem:[#allocation5 + $0x58] sm:$0xff]
    %v222 = vld [vmem:[#allocation5 + $0x60] sm:$0xff]
    %v223 = vld [vmem:[#allocation5 + $0x68] sm:$0xff]
    %v224 = vld [vmem:[#allocation5 + $0x70] sm:$0xff]
    %v225 = vld [vmem:[#allocation5 + $0x78] sm:$0xff]
    %v226 = vld [vmem:[#allocation5 + $0x80] sm:$0xff]
    %v227 = vld [vmem:[#allocation5 + $0x88] sm:$0xff]
    %v228 = vld [vmem:[#allocation5 + $0x90] sm:$0xff]
    %v229 = vld [vmem:[#allocation5 + $0x98] sm:$0xff]
    %v230 = vld [vmem:[#allocation5 + $0xa0] sm:$0xff]
    %v231 = vld [vmem:[#allocation5 + $0xa8] sm:$0xff]
    %v232 = vld [vmem:[#allocation5 + $0xb0] sm:$0xff]
    %v233 = vld [vmem:[#allocation5 + $0xb8] sm:$0xff]
    %v234 = vld [vmem:[#allocation5 + $0xc0] sm:$0xff]
    %v235 = vld [vmem:[#allocation5 + $0xc8] sm:$0xff]
    %v236 = vld [vmem:[#allocation5 + $0xd0] sm:$0xff]
    %v237 = vld [vmem:[#allocation5 + $0xd8] sm:$0xff]
    %v238 = vld [vmem:[#allocation5 + $0xe0] sm:$0xff]
    %v239 = vld [vmem:[#allocation5 + $0xe8] sm:$0xff]
    %v240 = vld [vmem:[#allocation5 + $0xf0] sm:$0xff]
    %v241 = vld [vmem:[#allocation5 + $0xf8] sm:$0xff]
    %v242 = vld [vmem:[#allocation5 + $0x100] sm:$0xff]
    %v243 = vld [vmem:[#allocation5 + $0x108] sm:$0xff]
    %v244 = vld [vmem:[#allocation5 + $0x110] sm:$0xff]
    %v245 = vld [vmem:[#allocation5 + $0x118] sm:$0xff]
    %v246 = vld [vmem:[#allocation5 + $0x120] sm:$0xff]
    %v247 = vld [vmem:[#allocation5 + $0x128] sm:$0xff]
    %v248 = vld [vmem:[#allocation5 + $0x130] sm:$0xff]
    %v249 = vld [vmem:[#allocation5 + $0x138] sm:$0xff]
    %v250 = vld [vmem:[#allocation5 + $0x140] sm:$0xff]
    %v251 = vld [vmem:[#allocation5 + $0x148] sm:$0xff]
    %v252 = vld [vmem:[#allocation5 + $0x150] sm:$0xff]
    %v253 = vld [vmem:[#allocation5 + $0x158] sm:$0xff]
    %v254 = vld [vmem:[#allocation5 + $0x160] sm:$0xff]
    %v255 = vld [vmem:[#allocation5 + $0x168] sm:$0xff]
    %v256 = vld [vmem:[#allocation5 + $0x170] sm:$0xff]
    %v257 = vld [vmem:[#allocation5 + $0x178] sm:$0xff]
    %v258 = vld [vmem:[#allocation5 + $0x180] sm:$0xff]
    %v259 = vld [vmem:[#allocation5 + $0x188] sm:$0xff]
    %v260 = vld [vmem:[#allocation5 + $0x190] sm:$0xff]
    %v261 = vld [vmem:[#allocation5 + $0x198] sm:$0xff]
    %v262 = vld [vmem:[#allocation5 + $0x1a0] sm:$0xff]
    %v263 = vld [vmem:[#allocation5 + $0x1a8] sm:$0xff]
    %v264 = vld [vmem:[#allocation5 + $0x1b0] sm:$0xff]
    %v265 = vld [vmem:[#allocation5 + $0x1b8] sm:$0xff]
    %v266 = vld [vmem:[#allocation5 + $0x1c0] sm:$0xff]
    %v267 = vld [vmem:[#allocation5 + $0x1c8] sm:$0xff]
    %v268 = vld [vmem:[#allocation5 + $0x1d0] sm:$0xff]
    %v269 = vld [vmem:[#allocation5 + $0x1d8] sm:$0xff]
    %v270 = vld [vmem:[#allocation5 + $0x1e0] sm:$0xff]
    %v271 = vld [vmem:[#allocation5 + $0x1e8] sm:$0xff]
    %v272 = vld [vmem:[#allocation5 + $0x1f0] sm:$0xff]
    %v273 = vld [vmem:[#allocation5 + $0x1f8] sm:$0xff]
    %v274 = vld [vmem:[#allocation5 + $0x200] sm:$0xff]
    %v275 = vld [vmem:[#allocation5 + $0x208] sm:$0xff]
    %v276 = vld [vmem:[#allocation5 + $0x210] sm:$0xff]
    %v277 = vld [vmem:[#allocation5 + $0x218] sm:$0xff]
    %v278 = vld [vmem:[#allocation5 + $0x220] sm:$0xff]
    %v279 = vld [vmem:[#allocation5 + $0x228] sm:$0xff]
    %v280 = vld [vmem:[#allocation5 + $0x230] sm:$0xff]
    %v281 = vld [vmem:[#allocation5 + $0x238] sm:$0xff]
    %v282 = vld [vmem:[#allocation5 + $0x240] sm:$0xff]
    %v283 = vld [vmem:[#allocation5 + $0x248] sm:$0xff]
    %v284 = vld [vmem:[#allocation5 + $0x250] sm:$0xff]
    %v285 = vld [vmem:[#allocation5 + $0x258] sm:$0xff]
    %v286 = vld [vmem:[#allocation5 + $0x260] sm:$0xff]
    %v287 = vld [vmem:[#allocation5 + $0x268] sm:$0xff]
    %v288 = vld [vmem:[#allocation5 + $0x270] sm:$0xff]
    %v289 = vld [vmem:[#allocation5 + $0x278] sm:$0xff]
    %v290 = vld [vmem:[#allocation5 + $0x280] sm:$0xff]
    %v291 = vld [vmem:[#allocation5 + $0x288] sm:$0xff]
    %v292 = vld [vmem:[#allocation5 + $0x290] sm:$0xff]
    %v293 = vld [vmem:[#allocation5 + $0x298] sm:$0xff]
    %v294 = vld [vmem:[#allocation5 + $0x2a0] sm:$0xff]
    %v295 = vld [vmem:[#allocation5 + $0x2a8] sm:$0xff]
    %v296 = vld [vmem:[#allocation5 + $0x2b0] sm:$0xff]
    %v297 = vld [vmem:[#allocation5 + $0x2b8] sm:$0xff]
    %v298 = vld [vmem:[#allocation5 + $0x2c0] sm:$0xff]
    %v299 = vld [vmem:[#allocation5 + $0x2c8] sm:$0xff]
    %v300 = vld [vmem:[#allocation5 + $0x2d0] sm:$0xff]
    %v301 = vld [vmem:[#allocation5 + $0x2d8] sm:$0xff]
    %v302 = vld [vmem:[#allocation5 + $0x2e0] sm:$0xff]
    %v303 = vld [vmem:[#allocation5 + $0x2e8] sm:$0xff]
    %v304 = vld [vmem:[#allocation5 + $0x2f0] sm:$0xff]
    %v305 = vld [vmem:[#allocation5 + $0x2f8] sm:$0xff]
    %v306 = vld [vmem:[#allocation5 + $0x300] sm:$0xff]
    %v307 = vld [vmem:[#allocation5 + $0x308] sm:$0xff]
    %v308 = vld [vmem:[#allocation5 + $0x310] sm:$0xff]
    %v309 = vld [vmem:[#allocation5 + $0x318] sm:$0xff]
    %v310 = vld [vmem:[#allocation7] sm:$0xff]
    %v311 = vld [vmem:[#allocation7 + $0x8] sm:$0xff]
    %v312 = vld [vmem:[#allocation7 + $0x10] sm:$0xff]
    %v313 = vld [vmem:[#allocation7 + $0x18] sm:$0xff]
    %v314 = vld [vmem:[#allocation7 + $0x20] sm:$0xff]
    %v315 = vld [vmem:[#allocation7 + $0x28] sm:$0xff]
    %v316 = vld [vmem:[#allocation7 + $0x30] sm:$0xff]
    %v317 = vld [vmem:[#allocation7 + $0x38] sm:$0xff]
    %v318 = vld [vmem:[#allocation7 + $0x40] sm:$0xff]
    %v319 = vld [vmem:[#allocation7 + $0x48] sm:$0xff]
    %v320 = vld [vmem:[#allocation7 + $0x50] sm:$0xff]
    %v321 = vld [vmem:[#allocation7 + $0x58] sm:$0xff]
    %v322 = vld [vmem:[#allocation7 + $0x60] sm:$0xff]
    %v323 = vld [vmem:[#allocation7 + $0x68] sm:$0xff]
    %v324 = vld [vmem:[#allocation7 + $0x70] sm:$0xff]
    %v325 = vld [vmem:[#allocation7 + $0x78] sm:$0xff]
    %v326 = vld [vmem:[#allocation7 + $0x80] sm:$0xff]
    %v327 = vld [vmem:[#allocation7 + $0x88] sm:$0xff]
    %v328 = vld [vmem:[#allocation7 + $0x90] sm:$0xff]
    %v329 = vld [vmem:[#allocation7 + $0x98] sm:$0xff]
    %v330 = vld [vmem:[#allocation7 + $0xa0] sm:$0xff]
    %v331 = vld [vmem:[#allocation7 + $0xa8] sm:$0xff]
    %v332 = vld [vmem:[#allocation7 + $0xb0] sm:$0xff]
    %v333 = vld [vmem:[#allocation7 + $0xb8] sm:$0xff]
    %v334 = vld [vmem:[#allocation7 + $0xc0] sm:$0xff]
    %v335 = vld [vmem:[#allocation7 + $0xc8] sm:$0xff]
    %v336 = vld [vmem:[#allocation7 + $0xd0] sm:$0xff]
    %v337 = vld [vmem:[#allocation7 + $0xd8] sm:$0xff]
    %v338 = vld [vmem:[#allocation7 + $0xe0] sm:$0xff]
    %v339 = vld [vmem:[#allocation7 + $0xe8] sm:$0xff]
    %v340 = vld [vmem:[#allocation7 + $0xf0] sm:$0xff]
    %v341 = vld [vmem:[#allocation7 + $0xf8] sm:$0xff]
    %v342 = vld [vmem:[#allocation7 + $0x100] sm:$0xff]
    %v343 = vld [vmem:[#allocation7 + $0x108] sm:$0xff]
    %v344 = vld [vmem:[#allocation7 + $0x110] sm:$0xff]
    %v345 = vld [vmem:[#allocation7 + $0x118] sm:$0xff]
    %v346 = vld [vmem:[#allocation7 + $0x120] sm:$0xff]
    %v347 = vld [vmem:[#allocation7 + $0x128] sm:$0xff]
    %v348 = vld [vmem:[#allocation7 + $0x130] sm:$0xff]
    %v349 = vld [vmem:[#allocation7 + $0x138] sm:$0xff]
    %v350 = vld [vmem:[#allocation7 + $0x140] sm:$0xff]
    %v351 = vld [vmem:[#allocation7 + $0x148] sm:$0xff]
    %v352 = vld [vmem:[#allocation7 + $0x150] sm:$0xff]
    %v353 = vld [vmem:[#allocation7 + $0x158] sm:$0xff]
    %v354 = vld [vmem:[#allocation7 + $0x160] sm:$0xff]
    %v355 = vld [vmem:[#allocation7 + $0x168] sm:$0xff]
    %v356 = vld [vmem:[#allocation7 + $0x170] sm:$0xff]
    %v357 = vld [vmem:[#allocation7 + $0x178] sm:$0xff]
    %v358 = vld [vmem:[#allocation7 + $0x180] sm:$0xff]
    %v359 = vld [vmem:[#allocation7 + $0x188] sm:$0xff]
    %v360 = vld [vmem:[#allocation7 + $0x190] sm:$0xff]
    %v361 = vld [vmem:[#allocation7 + $0x198] sm:$0xff]
    %v362 = vld [vmem:[#allocation7 + $0x1a0] sm:$0xff]
    %v363 = vld [vmem:[#allocation7 + $0x1a8] sm:$0xff]
    %v364 = vld [vmem:[#allocation7 + $0x1b0] sm:$0xff]
    %v365 = vld [vmem:[#allocation7 + $0x1b8] sm:$0xff]
    %v366 = vld [vmem:[#allocation7 + $0x1c0] sm:$0xff]
    %v367 = vld [vmem:[#allocation7 + $0x1c8] sm:$0xff]
    %v368 = vld [vmem:[#allocation7 + $0x1d0] sm:$0xff]
    %v369 = vld [vmem:[#allocation7 + $0x1d8] sm:$0xff]
    %v370 = vld [vmem:[#allocation7 + $0x1e0] sm:$0xff]
    %v371 = vld [vmem:[#allocation7 + $0x1e8] sm:$0xff]
    %v372 = vld [vmem:[#allocation7 + $0x1f0] sm:$0xff]
    %v373 = vld [vmem:[#allocation7 + $0x1f8] sm:$0xff]
    %v374 = vld [vmem:[#allocation7 + $0x200] sm:$0xff]
    %v375 = vld [vmem:[#allocation7 + $0x208] sm:$0xff]
    %v376 = vld [vmem:[#allocation7 + $0x210] sm:$0xff]
    %v377 = vld [vmem:[#allocation7 + $0x218] sm:$0xff]
    %v378 = vld [vmem:[#allocation7 + $0x220] sm:$0xff]
    %v379 = vld [vmem:[#allocation7 + $0x228] sm:$0xff]
    %v380 = vld [vmem:[#allocation7 + $0x230] sm:$0xff]
    %v381 = vld [vmem:[#allocation7 + $0x238] sm:$0xff]
    %v382 = vld [vmem:[#allocation7 + $0x240] sm:$0xff]
    %v383 = vld [vmem:[#allocation7 + $0x248] sm:$0xff]
    %v384 = vld [vmem:[#allocation7 + $0x250] sm:$0xff]
    %v385 = vld [vmem:[#allocation7 + $0x258] sm:$0xff]
    %v386 = vld [vmem:[#allocation7 + $0x260] sm:$0xff]
    %v387 = vld [vmem:[#allocation7 + $0x268] sm:$0xff]
    %v388 = vld [vmem:[#allocation7 + $0x270] sm:$0xff]
    %v389 = vld [vmem:[#allocation7 + $0x278] sm:$0xff]
    %v390 = vld [vmem:[#allocation7 + $0x280] sm:$0xff]
    %v391 = vld [vmem:[#allocation7 + $0x288] sm:$0xff]
    %v392 = vld [vmem:[#allocation7 + $0x290] sm:$0xff]
    %v393 = vld [vmem:[#allocation7 + $0x298] sm:$0xff]
    %v394 = vld [vmem:[#allocation7 + $0x2a0] sm:$0xff]
    %v395 = vld [vmem:[#allocation7 + $0x2a8] sm:$0xff]
    %v396 = vld [vmem:[#allocation7 + $0x2b0] sm:$0xff]
    %v397 = vld [vmem:[#allocation7 + $0x2b8] sm:$0xff]
    %v398 = vld [vmem:[#allocation7 + $0x2c0] sm:$0xff]
    %v399 = vld [vmem:[#allocation7 + $0x2c8] sm:$0xff]
    %v400 = vld [vmem:[#allocation7 + $0x2d0] sm:$0xff]
    %v401 = vld [vmem:[#allocation7 + $0x2d8] sm:$0xff]
    %v402 = vld [vmem:[#allocation7 + $0x2e0] sm:$0xff]
    %v403 = vld [vmem:[#allocation7 + $0x2e8] sm:$0xff]
    %v404 = vld [vmem:[#allocation7 + $0x2f0] sm:$0xff]
    %v405 = vld [vmem:[#allocation7 + $0x2f8] sm:$0xff]
    %v406 = vld [vmem:[#allocation7 + $0x300] sm:$0xff]
    %v407 = vld [vmem:[#allocation7 + $0x308] sm:$0xff]
    %v408 = vld [vmem:[#allocation7 + $0x310] sm:$0xff]
    %v409 = vld [vmem:[#allocation7 + $0x318] sm:$0xff]
    %v510 = vunpack.c.l.b16 %v210
    %v511 = vunpack.c.h.b16 %v210
    %v512 = vunpack.c.l.b16 %v211
    %v513 = vunpack.c.h.b16 %v211
    %v514 = vunpack.c.l.b16 %v212
    %v515 = vunpack.c.h.b16 %v212
    %v516 = vunpack.c.l.b16 %v213
    %v517 = vunpack.c.h.b16 %v213
    %v518 = vunpack.c.l.b16 %v214
    %v519 = vunpack.c.h.b16 %v214
    %v520 = vunpack.c.l.b16 %v215
    %v521 = vunpack.c.h.b16 %v215
    %v522 = vunpack.c.l.b16 %v216
    %v523 = vunpack.c.h.b16 %v216
    %v524 = vunpack.c.l.b16 %v217
    %v525 = vunpack.c.h.b16 %v217
    %v526 = vunpack.c.l.b16 %v218
    %v527 = vunpack.c.h.b16 %v218
    %v528 = vunpack.c.l.b16 %v219
    %v529 = vunpack.c.h.b16 %v219
    %v530 = vunpack.c.l.b16 %v220
    %v531 = vunpack.c.h.b16 %v220
    %v532 = vunpack.c.l.b16 %v221
    %v533 = vunpack.c.h.b16 %v221
    %v534 = vunpack.c.l.b16 %v222
    %v535 = vunpack.c.h.b16 %v222
    %v536 = vunpack.c.l.b16 %v223
    %v537 = vunpack.c.h.b16 %v223
    %v538 = vunpack.c.l.b16 %v224
    %v539 = vunpack.c.h.b16 %v224
    %v540 = vunpack.c.l.b16 %v225
    %v541 = vunpack.c.h.b16 %v225
    %v542 = vunpack.c.l.b16 %v226
    %v543 = vunpack.c.h.b16 %v226
    %v544 = vunpack.c.l.b16 %v227
    %v545 = vunpack.c.h.b16 %v227
    %v546 = vunpack.c.l.b16 %v228
    %v547 = vunpack.c.h.b16 %v228
    %v548 = vunpack.c.l.b16 %v229
    %v549 = vunpack.c.h.b16 %v229
    %v550 = vunpack.c.l.b16 %v230
    %v551 = vunpack.c.h.b16 %v230
    %v552 = vunpack.c.l.b16 %v231
    %v553 = vunpack.c.h.b16 %v231
    %v554 = vunpack.c.l.b16 %v232
    %v555 = vunpack.c.h.b16 %v232
    %v556 = vunpack.c.l.b16 %v233
    %v557 = vunpack.c.h.b16 %v233
    %v558 = vunpack.c.l.b16 %v234
    %v559 = vunpack.c.h.b16 %v234
    %v560 = vunpack.c.l.b16 %v235
    %v561 = vunpack.c.h.b16 %v235
    %v562 = vunpack.c.l.b16 %v236
    %v563 = vunpack.c.h.b16 %v236
    %v564 = vunpack.c.l.b16 %v237
    %v565 = vunpack.c.h.b16 %v237
    %v566 = vunpack.c.l.b16 %v238
    %v567 = vunpack.c.h.b16 %v238
    %v568 = vunpack.c.l.b16 %v239
    %v569 = vunpack.c.h.b16 %v239
    %v570 = vunpack.c.l.b16 %v240
    %v571 = vunpack.c.h.b16 %v240
    %v572 = vunpack.c.l.b16 %v241
    %v573 = vunpack.c.h.b16 %v241
    %v574 = vunpack.c.l.b16 %v242
    %v575 = vunpack.c.h.b16 %v242
    %v576 = vunpack.c.l.b16 %v243
    %v577 = vunpack.c.h.b16 %v243
    %v578 = vunpack.c.l.b16 %v244
    %v579 = vunpack.c.h.b16 %v244
    %v580 = vunpack.c.l.b16 %v245
    %v581 = vunpack.c.h.b16 %v245
    %v582 = vunpack.c.l.b16 %v246
    %v583 = vunpack.c.h.b16 %v246
    %v584 = vunpack.c.l.b16 %v247
    %v585 = vunpack.c.h.b16 %v247
    %v586 = vunpack.c.l.b16 %v248
    %v587 = vunpack.c.h.b16 %v248
    %v588 = vunpack.c.l.b16 %v249
    %v589 = vunpack.c.h.b16 %v249
    %v590 = vunpack.c.l.b16 %v250
    %v591 = vunpack.c.h.b16 %v250
    %v592 = vunpack.c.l.b16 %v251
    %v593 = vunpack.c.h.b16 %v251
    %v594 = vunpack.c.l.b16 %v252
    %v595 = vunpack.c.h.b16 %v252
    %v596 = vunpack.c.l.b16 %v253
    %v597 = vunpack.c.h.b16 %v253
    %v598 = vunpack.c.l.b16 %v254
    %v599 = vunpack.c.h.b16 %v254
    %v600 = vunpack.c.l.b16 %v255
    %v601 = vunpack.c.h.b16 %v255
    %v602 = vunpack.c.l.b16 %v256
    %v603 = vunpack.c.h.b16 %v256
    %v604 = vunpack.c.l.b16 %v257
    %v605 = vunpack.c.h.b16 %v257
    %v606 = vunpack.c.l.b16 %v258
    %v607 = vunpack.c.h.b16 %v258
    %v608 = vunpack.c.l.b16 %v259
    %v609 = vunpack.c.h.b16 %v259
    %v610 = vunpack.c.l.b16 %v260
    %v611 = vunpack.c.h.b16 %v260
    %v612 = vunpack.c.l.b16 %v261
    %v613 = vunpack.c.h.b16 %v261
    %v614 = vunpack.c.l.b16 %v262
    %v615 = vunpack.c.h.b16 %v262
    %v616 = vunpack.c.l.b16 %v263
    %v617 = vunpack.c.h.b16 %v263
    %v618 = vunpack.c.l.b16 %v264
    %v619 = vunpack.c.h.b16 %v264
    %v620 = vunpack.c.l.b16 %v265
    %v621 = vunpack.c.h.b16 %v265
    %v622 = vunpack.c.l.b16 %v266
    %v623 = vunpack.c.h.b16 %v266
    %v624 = vunpack.c.l.b16 %v267
    %v625 = vunpack.c.h.b16 %v267
    %v626 = vunpack.c.l.b16 %v268
    %v627 = vunpack.c.h.b16 %v268
    %v628 = vunpack.c.l.b16 %v269
    %v629 = vunpack.c.h.b16 %v269
    %v630 = vunpack.c.l.b16 %v270
    %v631 = vunpack.c.h.b16 %v270
    %v632 = vunpack.c.l.b16 %v271
    %v633 = vunpack.c.h.b16 %v271
    %v634 = vunpack.c.l.b16 %v272
    %v635 = vunpack.c.h.b16 %v272
    %v636 = vunpack.c.l.b16 %v273
    %v637 = vunpack.c.h.b16 %v273
    %v638 = vunpack.c.l.b16 %v274
    %v639 = vunpack.c.h.b16 %v274
    %v640 = vunpack.c.l.b16 %v275
    %v641 = vunpack.c.h.b16 %v275
    %v642 = vunpack.c.l.b16 %v276
    %v643 = vunpack.c.h.b16 %v276
    %v644 = vunpack.c.l.b16 %v277
    %v645 = vunpack.c.h.b16 %v277
    %v646 = vunpack.c.l.b16 %v278
    %v647 = vunpack.c.h.b16 %v278
    %v648 = vunpack.c.l.b16 %v279
    %v649 = vunpack.c.h.b16 %v279
    %v650 = vunpack.c.l.b16 %v280
    %v651 = vunpack.c.h.b16 %v280
    %v652 = vunpack.c.l.b16 %v281
    %v653 = vunpack.c.h.b16 %v281
    %v654 = vunpack.c.l.b16 %v282
    %v655 = vunpack.c.h.b16 %v282
    %v656 = vunpack.c.l.b16 %v283
    %v657 = vunpack.c.h.b16 %v283
    %v658 = vunpack.c.l.b16 %v284
    %v659 = vunpack.c.h.b16 %v284
    %v660 = vunpack.c.l.b16 %v285
    %v661 = vunpack.c.h.b16 %v285
    %v662 = vunpack.c.l.b16 %v286
    %v663 = vunpack.c.h.b16 %v286
    %v664 = vunpack.c.l.b16 %v287
    %v665 = vunpack.c.h.b16 %v287
    %v666 = vunpack.c.l.b16 %v288
    %v667 = vunpack.c.h.b16 %v288
    %v668 = vunpack.c.l.b16 %v289
    %v669 = vunpack.c.h.b16 %v289
    %v670 = vunpack.c.l.b16 %v290
    %v671 = vunpack.c.h.b16 %v290
    %v672 = vunpack.c.l.b16 %v291
    %v673 = vunpack.c.h.b16 %v291
    %v674 = vunpack.c.l.b16 %v292
    %v675 = vunpack.c.h.b16 %v292
    %v676 = vunpack.c.l.b16 %v293
    %v677 = vunpack.c.h.b16 %v293
    %v678 = vunpack.c.l.b16 %v294
    %v679 = vunpack.c.h.b16 %v294
    %v680 = vunpack.c.l.b16 %v295
    %v681 = vunpack.c.h.b16 %v295
    %v682 = vunpack.c.l.b16 %v296
    %v683 = vunpack.c.h.b16 %v296
    %v684 = vunpack.c.l.b16 %v297
    %v685 = vunpack.c.h.b16 %v297
    %v686 = vunpack.c.l.b16 %v298
    %v687 = vunpack.c.h.b16 %v298
    %v688 = vunpack.c.l.b16 %v299
    %v689 = vunpack.c.h.b16 %v299
    %v690 = vunpack.c.l.b16 %v300
    %v691 = vunpack.c.h.b16 %v300
    %v692 = vunpack.c.l.b16 %v301
    %v693 = vunpack.c.h.b16 %v301
    %v694 = vunpack.c.l.b16 %v302
    %v695 = vunpack.c.h.b16 %v302
    %v696 = vunpack.c.l.b16 %v303
    %v697 = vunpack.c.h.b16 %v303
    %v698 = vunpack.c.l.b16 %v304
    %v699 = vunpack.c.h.b16 %v304
    %v700 = vunpack.c.l.b16 %v305
    %v701 = vunpack.c.h.b16 %v305
    %v702 = vunpack.c.l.b16 %v306
    %v703 = vunpack.c.h.b16 %v306
    %v704 = vunpack.c.l.b16 %v307
    %v705 = vunpack.c.h.b16 %v307
    %v706 = vunpack.c.l.b16 %v308
    %v707 = vunpack.c.h.b16 %v308
    %v708 = vunpack.c.l.b16 %v309
    %v709 = vunpack.c.h.b16 %v309
    %v710 = vpack.c.b16 %v514, %v510
    %v711 = vpack.c.b16 %v515, %v511
    %v712 = vpack.c.b16 %v516, %v512
    %v713 = vpack.c.b16 %v517, %v513
    %v714 = vpack.c.b16 %v522, %v518
    %v715 = vpack.c.b16 %v523, %v519
    %v716 = vpack.c.b16 %v524, %v520
    %v717 = vpack.c.b16 %v525, %v521
    %v718 = vpack.c.b16 %v530, %v526
    %v719 = vpack.c.b16 %v531, %v527
    %v720 = vpack.c.b16 %v532, %v528
    %v721 = vpack.c.b16 %v533, %v529
    %v722 = vpack.c.b16 %v538, %v534
    %v723 = vpack.c.b16 %v539, %v535
    %v724 = vpack.c.b16 %v540, %v536
    %v725 = vpack.c.b16 %v541, %v537
    %v726 = vpack.c.b16 %v546, %v542
    %v727 = vpack.c.b16 %v547, %v543
    %v728 = vpack.c.b16 %v548, %v544
    %v729 = vpack.c.b16 %v549, %v545
    %v730 = vpack.c.b16 %v554, %v550
    %v731 = vpack.c.b16 %v555, %v551
    %v732 = vpack.c.b16 %v556, %v552
    %v733 = vpack.c.b16 %v557, %v553
    %v734 = vpack.c.b16 %v562, %v558
    %v735 = vpack.c.b16 %v563, %v559
    %v736 = vpack.c.b16 %v564, %v560
    %v737 = vpack.c.b16 %v565, %v561
    %v738 = vpack.c.b16 %v570, %v566
    %v739 = vpack.c.b16 %v571, %v567
    %v740 = vpack.c.b16 %v572, %v568
    %v741 = vpack.c.b16 %v573, %v569
    %v742 = vpack.c.b16 %v578, %v574
    %v743 = vpack.c.b16 %v579, %v575
    %v744 = vpack.c.b16 %v580, %v576
    %v745 = vpack.c.b16 %v581, %v577
    %v746 = vpack.c.b16 %v586, %v582
    %v747 = vpack.c.b16 %v587, %v583
    %v748 = vpack.c.b16 %v588, %v584
    %v749 = vpack.c.b16 %v589, %v585
    %v750 = vpack.c.b16 %v594, %v590
    %v751 = vpack.c.b16 %v595, %v591
    %v752 = vpack.c.b16 %v596, %v592
    %v753 = vpack.c.b16 %v597, %v593
    %v754 = vpack.c.b16 %v602, %v598
    %v755 = vpack.c.b16 %v603, %v599
    %v756 = vpack.c.b16 %v604, %v600
    %v757 = vpack.c.b16 %v605, %v601
    %v758 = vpack.c.b16 %v610, %v606
    %v759 = vpack.c.b16 %v611, %v607
    %v760 = vpack.c.b16 %v612, %v608
    %v761 = vpack.c.b16 %v613, %v609
    %v762 = vpack.c.b16 %v618, %v614
    %v763 = vpack.c.b16 %v619, %v615
    %v764 = vpack.c.b16 %v620, %v616
    %v765 = vpack.c.b16 %v621, %v617
    %v766 = vpack.c.b16 %v626, %v622
    %v767 = vpack.c.b16 %v627, %v623
    %v768 = vpack.c.b16 %v628, %v624
    %v769 = vpack.c.b16 %v629, %v625
    %v770 = vpack.c.b16 %v634, %v630
    %v771 = vpack.c.b16 %v635, %v631
    %v772 = vpack.c.b16 %v636, %v632
    %v773 = vpack.c.b16 %v637, %v633
    %v774 = vpack.c.b16 %v642, %v638
    %v775 = vpack.c.b16 %v643, %v639
    %v776 = vpack.c.b16 %v644, %v640
    %v777 = vpack.c.b16 %v645, %v641
    %v778 = vpack.c.b16 %v650, %v646
    %v779 = vpack.c.b16 %v651, %v647
    %v780 = vpack.c.b16 %v652, %v648
    %v781 = vpack.c.b16 %v653, %v649
    %v782 = vpack.c.b16 %v658, %v654
    %v783 = vpack.c.b16 %v659, %v655
    %v784 = vpack.c.b16 %v660, %v656
    %v785 = vpack.c.b16 %v661, %v657
    %v786 = vpack.c.b16 %v666, %v662
    %v787 = vpack.c.b16 %v667, %v663
    %v788 = vpack.c.b16 %v668, %v664
    %v789 = vpack.c.b16 %v669, %v665
    %v790 = vpack.c.b16 %v674, %v670
    %v791 = vpack.c.b16 %v675, %v671
    %v792 = vpack.c.b16 %v676, %v672
    %v793 = vpack.c.b16 %v677, %v673
    %v794 = vpack.c.b16 %v682, %v678
    %v795 = vpack.c.b16 %v683, %v679
    %v796 = vpack.c.b16 %v684, %v680
    %v797 = vpack.c.b16 %v685, %v681
    %v798 = vpack.c.b16 %v690, %v686
    %v799 = vpack.c.b16 %v691, %v687
    %v800 = vpack.c.b16 %v692, %v688
    %v801 = vpack.c.b16 %v693, %v689
    %v802 = vpack.c.b16 %v698, %v694
    %v803 = vpack.c.b16 %v699, %v695
    %v804 = vpack.c.b16 %v700, %v696
    %v805 = vpack.c.b16 %v701, %v697
    %v806 = vpack.c.b16 %v706, %v702
    %v807 = vpack.c.b16 %v707, %v703
    %v808 = vpack.c.b16 %v708, %v704
    %v809 = vpack.c.b16 %v709, %v705
    %vm910 = vcmask 130048
    %v912 = vsel %vm910, %v197, 0
    %v915 = vsel %vm910, %v201, 0
    %v918 = vsel %vm910, %v205, 0
    %v921 = vsel %vm910, %v209, 0
    %923 = vmatpush.bf16.msra.mxu0 %v738
    %924 = vmatpush.bf16.msra.mxu0 %v734
    %925 = vmatpush.bf16.msra.mxu0 %v730
    %926 = vmatpush.bf16.msra.mxu0 %v726
    %927 = vmatpush.bf16.msra.mxu0 %v722
    %928 = vmatpush.bf16.msra.mxu0 %v718
    %929 = vmatpush.bf16.msra.mxu0 %v714
    %930 = vmatpush.bf16.msra.mxu0 %v710
    %931 = vmatmul.bf16.gmra.mxu0 %v194
    %v932 = vpop.f32.mrf.mxu0
    %v933 = vadd.f32 0.0, %v932
    %v934 = vpop.f32.mrf.mxu0
    %v935 = vadd.f32 0.0, %v934
    %936 = vmatmul.bf16.gmra.mxu0 %v198
    %v937 = vpop.f32.mrf.mxu0
    %v938 = vadd.f32 0.0, %v937
    %v939 = vpop.f32.mrf.mxu0
    %v940 = vadd.f32 0.0, %v939
    %941 = vmatmul.bf16.gmra.mxu0 %v202
    %v942 = vpop.f32.mrf.mxu0
    %v943 = vadd.f32 0.0, %v942
    %v944 = vpop.f32.mrf.mxu0
    %v945 = vadd.f32 0.0, %v944
    %946 = vmatmul.bf16.gmra.mxu0 %v206
    %v947 = vpop.f32.mrf.mxu0
    %v948 = vadd.f32 0.0, %v947
    %v949 = vpop.f32.mrf.mxu0
    %v950 = vadd.f32 0.0, %v949
    %951 = vdwg.mxu0
    %952 = vmatpush.bf16.msra.mxu0 %v770
    %953 = vmatpush.bf16.msra.mxu0 %v766
    %954 = vmatpush.bf16.msra.mxu0 %v762
    %955 = vmatpush.bf16.msra.mxu0 %v758
    %956 = vmatpush.bf16.msra.mxu0 %v754
    %957 = vmatpush.bf16.msra.mxu0 %v750
    %958 = vmatpush.bf16.msra.mxu0 %v746
    %959 = vmatpush.bf16.msra.mxu0 %v742
    %960 = vmatmul.bf16.gmra.mxu0 %v195
    %v961 = vpop.f32.mrf.mxu0
    %v962 = vadd.f32 %v933, %v961
    %v963 = vpop.f32.mrf.mxu0
    %v964 = vadd.f32 %v935, %v963
    %965 = vmatmul.bf16.gmra.mxu0 %v199
    %v966 = vpop.f32.mrf.mxu0
    %v967 = vadd.f32 %v938, %v966
    %v968 = vpop.f32.mrf.mxu0
    %v969 = vadd.f32 %v940, %v968
    %970 = vmatmul.bf16.gmra.mxu0 %v203
    %v971 = vpop.f32.mrf.mxu0
    %v972 = vadd.f32 %v943, %v971
    %v973 = vpop.f32.mrf.mxu0
    %v974 = vadd.f32 %v945, %v973
    %975 = vmatmul.bf16.gmra.mxu0 %v207
    %v976 = vpop.f32.mrf.mxu0
    %v977 = vadd.f32 %v948, %v976
    %v978 = vpop.f32.mrf.mxu0
    %v979 = vadd.f32 %v950, %v978
    %980 = vdwg.mxu0
    %981 = vmatpush.bf16.msra.mxu0 %v802
    %982 = vmatpush.bf16.msra.mxu0 %v798
    %983 = vmatpush.bf16.msra.mxu0 %v794
    %984 = vmatpush.bf16.msra.mxu0 %v790
    %985 = vmatpush.bf16.msra.mxu0 %v786
    %986 = vmatpush.bf16.msra.mxu0 %v782
    %987 = vmatpush.bf16.msra.mxu0 %v778
    %988 = vmatpush.bf16.msra.mxu0 %v774
    %989 = vmatmul.bf16.gmra.mxu0 %v196
    %v990 = vpop.f32.mrf.mxu0
    %v991 = vadd.f32 %v962, %v990
    %v992 = vpop.f32.mrf.mxu0
    %v993 = vadd.f32 %v964, %v992
    %994 = vmatmul.bf16.gmra.mxu0 %v200
    %v995 = vpop.f32.mrf.mxu0
    %v996 = vadd.f32 %v967, %v995
    %v997 = vpop.f32.mrf.mxu0
    %v998 = vadd.f32 %v969, %v997
    %999 = vmatmul.bf16.gmra.mxu0 %v204
    %v1000 = vpop.f32.mrf.mxu0
    %v1001 = vadd.f32 %v972, %v1000
    %v1002 = vpop.f32.mrf.mxu0
    %v1003 = vadd.f32 %v974, %v1002
    %1004 = vmatmul.bf16.gmra.mxu0 %v208
    %v1005 = vpop.f32.mrf.mxu0
    %v1006 = vadd.f32 %v977, %v1005
    %v1007 = vpop.f32.mrf.mxu0
    %v1008 = vadd.f32 %v979, %v1007
    %1009 = vdwg.mxu0
    %1010 = vmatpush.bf16.msra.mxu0 0
    %1011 = vmatpush.bf16.msra.mxu0 0
    %1012 = vmatpush.bf16.msra.mxu0 0
    %1013 = vmatpush.bf16.msra.mxu0 0
    %1014 = vmatpush.bf16.msra.mxu0 0
    %1015 = vmatpush.bf16.msra.mxu0 0
    %1016 = vmatpush.bf16.msra.mxu0 0
    %1017 = vmatpush.bf16.msra.mxu0 %v806
    %1018 = vmatmul.bf16.gmra.mxu0 %v912
    %v1019 = vpop.f32.mrf.mxu0
    %v1020 = vadd.f32 %v991, %v1019
    %v1021 = vpop.f32.mrf.mxu0
    %v1022 = vadd.f32 %v993, %v1021
    %1023 = vmatmul.bf16.gmra.mxu0 %v915
    %v1024 = vpop.f32.mrf.mxu0
    %v1025 = vadd.f32 %v996, %v1024
    %v1026 = vpop.f32.mrf.mxu0
    %v1027 = vadd.f32 %v998, %v1026
    %1028 = vmatmul.bf16.gmra.mxu0 %v918
    %v1029 = vpop.f32.mrf.mxu0
    %v1030 = vadd.f32 %v1001, %v1029
    %v1031 = vpop.f32.mrf.mxu0
    %v1032 = vadd.f32 %v1003, %v1031
    %1033 = vmatmul.bf16.gmra.mxu0 %v921
    %v1034 = vpop.f32.mrf.mxu0
    %v1035 = vadd.f32 %v1006, %v1034
    %v1036 = vpop.f32.mrf.mxu0
    %v1037 = vadd.f32 %v1008, %v1036
    %1038 = vdwg.mxu0
    %1039 = vmatpush.bf16.msra.mxu0 %v739
    %1040 = vmatpush.bf16.msra.mxu0 %v735
    %1041 = vmatpush.bf16.msra.mxu0 %v731
    %1042 = vmatpush.bf16.msra.mxu0 %v727
    %1043 = vmatpush.bf16.msra.mxu0 %v723
    %1044 = vmatpush.bf16.msra.mxu0 %v719
    %1045 = vmatpush.bf16.msra.mxu0 %v715
    %1046 = vmatpush.bf16.msra.mxu0 %v711
    %1047 = vmatmul.bf16.gmra.mxu0 %v194
    %v1048 = vpop.f32.mrf.mxu0
    %v1049 = vadd.f32 0.0, %v1048
    %v1050 = vpop.f32.mrf.mxu0
    %v1051 = vadd.f32 0.0, %v1050
    %1052 = vmatmul.bf16.gmra.mxu0 %v198
    %v1053 = vpop.f32.mrf.mxu0
    %v1054 = vadd.f32 0.0, %v1053
    %v1055 = vpop.f32.mrf.mxu0
    %v1056 = vadd.f32 0.0, %v1055
    %1057 = vmatmul.bf16.gmra.mxu0 %v202
    %v1058 = vpop.f32.mrf.mxu0
    %v1059 = vadd.f32 0.0, %v1058
    %v1060 = vpop.f32.mrf.mxu0
    %v1061 = vadd.f32 0.0, %v1060
    %1062 = vmatmul.bf16.gmra.mxu0 %v206
    %v1063 = vpop.f32.mrf.mxu0
    %v1064 = vadd.f32 0.0, %v1063
    %v1065 = vpop.f32.mrf.mxu0
    %v1066 = vadd.f32 0.0, %v1065
    %1067 = vdwg.mxu0
    %1068 = vmatpush.bf16.msra.mxu0 %v771
    %1069 = vmatpush.bf16.msra.mxu0 %v767
    %1070 = vmatpush.bf16.msra.mxu0 %v763
    %1071 = vmatpush.bf16.msra.mxu0 %v759
    %1072 = vmatpush.bf16.msra.mxu0 %v755
    %1073 = vmatpush.bf16.msra.mxu0 %v751
    %1074 = vmatpush.bf16.msra.mxu0 %v747
    %1075 = vmatpush.bf16.msra.mxu0 %v743
    %1076 = vmatmul.bf16.gmra.mxu0 %v195
    %v1077 = vpop.f32.mrf.mxu0
    %v1078 = vadd.f32 %v1049, %v1077
    %v1079 = vpop.f32.mrf.mxu0
    %v1080 = vadd.f32 %v1051, %v1079
    %1081 = vmatmul.bf16.gmra.mxu0 %v199
    %v1082 = vpop.f32.mrf.mxu0
    %v1083 = vadd.f32 %v1054, %v1082
    %v1084 = vpop.f32.mrf.mxu0
    %v1085 = vadd.f32 %v1056, %v1084
    %1086 = vmatmul.bf16.gmra.mxu0 %v203
    %v1087 = vpop.f32.mrf.mxu0
    %v1088 = vadd.f32 %v1059, %v1087
    %v1089 = vpop.f32.mrf.mxu0
    %v1090 = vadd.f32 %v1061, %v1089
    %1091 = vmatmul.bf16.gmra.mxu0 %v207
    %v1092 = vpop.f32.mrf.mxu0
    %v1093 = vadd.f32 %v1064, %v1092
    %v1094 = vpop.f32.mrf.mxu0
    %v1095 = vadd.f32 %v1066, %v1094
    %1096 = vdwg.mxu0
    %1097 = vmatpush.bf16.msra.mxu0 %v803
    %1098 = vmatpush.bf16.msra.mxu0 %v799
    %1099 = vmatpush.bf16.msra.mxu0 %v795
    %1100 = vmatpush.bf16.msra.mxu0 %v791
    %1101 = vmatpush.bf16.msra.mxu0 %v787
    %1102 = vmatpush.bf16.msra.mxu0 %v783
    %1103 = vmatpush.bf16.msra.mxu0 %v779
    %1104 = vmatpush.bf16.msra.mxu0 %v775
    %1105 = vmatmul.bf16.gmra.mxu0 %v196
    %v1106 = vpop.f32.mrf.mxu0
    %v1107 = vadd.f32 %v1078, %v1106
    %v1108 = vpop.f32.mrf.mxu0
    %v1109 = vadd.f32 %v1080, %v1108
    %1110 = vmatmul.bf16.gmra.mxu0 %v200
    %v1111 = vpop.f32.mrf.mxu0
    %v1112 = vadd.f32 %v1083, %v1111
    %v1113 = vpop.f32.mrf.mxu0
    %v1114 = vadd.f32 %v1085, %v1113
    %1115 = vmatmul.bf16.gmra.mxu0 %v204
    %v1116 = vpop.f32.mrf.mxu0
    %v1117 = vadd.f32 %v1088, %v1116
    %v1118 = vpop.f32.mrf.mxu0
    %v1119 = vadd.f32 %v1090, %v1118
    %1120 = vmatmul.bf16.gmra.mxu0 %v208
    %v1121 = vpop.f32.mrf.mxu0
    %v1122 = vadd.f32 %v1093, %v1121
    %v1123 = vpop.f32.mrf.mxu0
    %v1124 = vadd.f32 %v1095, %v1123
    %1125 = vdwg.mxu0
    %1126 = vmatpush.bf16.msra.mxu0 0
    %1127 = vmatpush.bf16.msra.mxu0 0
    %1128 = vmatpush.bf16.msra.mxu0 0
    %1129 = vmatpush.bf16.msra.mxu0 0
    %1130 = vmatpush.bf16.msra.mxu0 0
    %1131 = vmatpush.bf16.msra.mxu0 0
    %1132 = vmatpush.bf16.msra.mxu0 0
    %1133 = vmatpush.bf16.msra.mxu0 %v807
    %1134 = vmatmul.bf16.gmra.mxu0 %v912
    %v1135 = vpop.f32.mrf.mxu0
    %v1136 = vadd.f32 %v1107, %v1135
    %v1137 = vpop.f32.mrf.mxu0
    %v1138 = vadd.f32 %v1109, %v1137
    %1139 = vmatmul.bf16.gmra.mxu0 %v915
    %v1140 = vpop.f32.mrf.mxu0
    %v1141 = vadd.f32 %v1112, %v1140
    %v1142 = vpop.f32.mrf.mxu0
    %v1143 = vadd.f32 %v1114, %v1142
    %1144 = vmatmul.bf16.gmra.mxu0 %v918
    %v1145 = vpop.f32.mrf.mxu0
    %v1146 = vadd.f32 %v1117, %v1145
    %v1147 = vpop.f32.mrf.mxu0
    %v1148 = vadd.f32 %v1119, %v1147
    %1149 = vmatmul.bf16.gmra.mxu0 %v921
    %v1150 = vpop.f32.mrf.mxu0
    %v1151 = vadd.f32 %v1122, %v1150
    %v1152 = vpop.f32.mrf.mxu0
    %v1153 = vadd.f32 %v1124, %v1152
    %1154 = vdwg.mxu0
    %1155 = vmatpush.bf16.msra.mxu0 %v740
    %1156 = vmatpush.bf16.msra.mxu0 %v736
    %1157 = vmatpush.bf16.msra.mxu0 %v732
    %1158 = vmatpush.bf16.msra.mxu0 %v728
    %1159 = vmatpush.bf16.msra.mxu0 %v724
    %1160 = vmatpush.bf16.msra.mxu0 %v720
    %1161 = vmatpush.bf16.msra.mxu0 %v716
    %1162 = vmatpush.bf16.msra.mxu0 %v712
    %1163 = vmatmul.bf16.gmra.mxu0 %v194
    %v1164 = vpop.f32.mrf.mxu0
    %v1165 = vadd.f32 0.0, %v1164
    %v1166 = vpop.f32.mrf.mxu0
    %v1167 = vadd.f32 0.0, %v1166
    %1168 = vmatmul.bf16.gmra.mxu0 %v198
    %v1169 = vpop.f32.mrf.mxu0
    %v1170 = vadd.f32 0.0, %v1169
    %v1171 = vpop.f32.mrf.mxu0
    %v1172 = vadd.f32 0.0, %v1171
    %1173 = vmatmul.bf16.gmra.mxu0 %v202
    %v1174 = vpop.f32.mrf.mxu0
    %v1175 = vadd.f32 0.0, %v1174
    %v1176 = vpop.f32.mrf.mxu0
    %v1177 = vadd.f32 0.0, %v1176
    %1178 = vmatmul.bf16.gmra.mxu0 %v206
    %v1179 = vpop.f32.mrf.mxu0
    %v1180 = vadd.f32 0.0, %v1179
    %v1181 = vpop.f32.mrf.mxu0
    %v1182 = vadd.f32 0.0, %v1181
    %1183 = vdwg.mxu0
    %1184 = vmatpush.bf16.msra.mxu0 %v772
    %1185 = vmatpush.bf16.msra.mxu0 %v768
    %1186 = vmatpush.bf16.msra.mxu0 %v764
    %1187 = vmatpush.bf16.msra.mxu0 %v760
    %1188 = vmatpush.bf16.msra.mxu0 %v756
    %1189 = vmatpush.bf16.msra.mxu0 %v752
    %1190 = vmatpush.bf16.msra.mxu0 %v748
    %1191 = vmatpush.bf16.msra.mxu0 %v744
    %1192 = vmatmul.bf16.gmra.mxu0 %v195
    %v1193 = vpop.f32.mrf.mxu0
    %v1194 = vadd.f32 %v1165, %v1193
    %v1195 = vpop.f32.mrf.mxu0
    %v1196 = vadd.f32 %v1167, %v1195
    %1197 = vmatmul.bf16.gmra.mxu0 %v199
    %v1198 = vpop.f32.mrf.mxu0
    %v1199 = vadd.f32 %v1170, %v1198
    %v1200 = vpop.f32.mrf.mxu0
    %v1201 = vadd.f32 %v1172, %v1200
    %1202 = vmatmul.bf16.gmra.mxu0 %v203
    %v1203 = vpop.f32.mrf.mxu0
    %v1204 = vadd.f32 %v1175, %v1203
    %v1205 = vpop.f32.mrf.mxu0
    %v1206 = vadd.f32 %v1177, %v1205
    %1207 = vmatmul.bf16.gmra.mxu0 %v207
    %v1208 = vpop.f32.mrf.mxu0
    %v1209 = vadd.f32 %v1180, %v1208
    %v1210 = vpop.f32.mrf.mxu0
    %v1211 = vadd.f32 %v1182, %v1210
    %1212 = vdwg.mxu0
    %1213 = vmatpush.bf16.msra.mxu0 %v804
    %1214 = vmatpush.bf16.msra.mxu0 %v800
    %1215 = vmatpush.bf16.msra.mxu0 %v796
    %1216 = vmatpush.bf16.msra.mxu0 %v792
    %1217 = vmatpush.bf16.msra.mxu0 %v788
    %1218 = vmatpush.bf16.msra.mxu0 %v784
    %1219 = vmatpush.bf16.msra.mxu0 %v780
    %1220 = vmatpush.bf16.msra.mxu0 %v776
    %1221 = vmatmul.bf16.gmra.mxu0 %v196
    %v1222 = vpop.f32.mrf.mxu0
    %v1223 = vadd.f32 %v1194, %v1222
    %v1224 = vpop.f32.mrf.mxu0
    %v1225 = vadd.f32 %v1196, %v1224
    %1226 = vmatmul.bf16.gmra.mxu0 %v200
    %v1227 = vpop.f32.mrf.mxu0
    %v1228 = vadd.f32 %v1199, %v1227
    %v1229 = vpop.f32.mrf.mxu0
    %v1230 = vadd.f32 %v1201, %v1229
    %1231 = vmatmul.bf16.gmra.mxu0 %v204
    %v1232 = vpop.f32.mrf.mxu0
    %v1233 = vadd.f32 %v1204, %v1232
    %v1234 = vpop.f32.mrf.mxu0
    %v1235 = vadd.f32 %v1206, %v1234
    %1236 = vmatmul.bf16.gmra.mxu0 %v208
    %v1237 = vpop.f32.mrf.mxu0
    %v1238 = vadd.f32 %v1209, %v1237
    %v1239 = vpop.f32.mrf.mxu0
    %v1240 = vadd.f32 %v1211, %v1239
    %1241 = vdwg.mxu0
    %1242 = vmatpush.bf16.msra.mxu0 0
    %1243 = vmatpush.bf16.msra.mxu0 0
    %1244 = vmatpush.bf16.msra.mxu0 0
    %1245 = vmatpush.bf16.msra.mxu0 0
    %1246 = vmatpush.bf16.msra.mxu0 0
    %1247 = vmatpush.bf16.msra.mxu0 0
    %1248 = vmatpush.bf16.msra.mxu0 0
    %1249 = vmatpush.bf16.msra.mxu0 %v808
    %1250 = vmatmul.bf16.gmra.mxu0 %v912
    %v1251 = vpop.f32.mrf.mxu0
    %v1252 = vadd.f32 %v1223, %v1251
    %v1253 = vpop.f32.mrf.mxu0
    %v1254 = vadd.f32 %v1225, %v1253
    %1255 = vmatmul.bf16.gmra.mxu0 %v915
    %v1256 = vpop.f32.mrf.mxu0
    %v1257 = vadd.f32 %v1228, %v1256
    %v1258 = vpop.f32.mrf.mxu0
    %v1259 = vadd.f32 %v1230, %v1258
    %1260 = vmatmul.bf16.gmra.mxu0 %v918
    %v1261 = vpop.f32.mrf.mxu0
    %v1262 = vadd.f32 %v1233, %v1261
    %v1263 = vpop.f32.mrf.mxu0
    %v1264 = vadd.f32 %v1235, %v1263
    %1265 = vmatmul.bf16.gmra.mxu0 %v921
    %v1266 = vpop.f32.mrf.mxu0
    %v1267 = vadd.f32 %v1238, %v1266
    %v1268 = vpop.f32.mrf.mxu0
    %v1269 = vadd.f32 %v1240, %v1268
    %1270 = vdwg.mxu0
    %1271 = vmatpush.bf16.msra.mxu0 %v741
    %1272 = vmatpush.bf16.msra.mxu0 %v737
    %1273 = vmatpush.bf16.msra.mxu0 %v733
    %1274 = vmatpush.bf16.msra.mxu0 %v729
    %1275 = vmatpush.bf16.msra.mxu0 %v725
    %1276 = vmatpush.bf16.msra.mxu0 %v721
    %1277 = vmatpush.bf16.msra.mxu0 %v717
    %1278 = vmatpush.bf16.msra.mxu0 %v713
    %1279 = vmatmul.bf16.gmra.mxu0 %v194
    %v1280 = vpop.f32.mrf.mxu0
    %v1281 = vadd.f32 0.0, %v1280
    %v1282 = vpop.f32.mrf.mxu0
    %v1283 = vadd.f32 0.0, %v1282
    %1284 = vmatmul.bf16.gmra.mxu0 %v198
    %v1285 = vpop.f32.mrf.mxu0
    %v1286 = vadd.f32 0.0, %v1285
    %v1287 = vpop.f32.mrf.mxu0
    %v1288 = vadd.f32 0.0, %v1287
    %1289 = vmatmul.bf16.gmra.mxu0 %v202
    %v1290 = vpop.f32.mrf.mxu0
    %v1291 = vadd.f32 0.0, %v1290
    %v1292 = vpop.f32.mrf.mxu0
    %v1293 = vadd.f32 0.0, %v1292
    %1294 = vmatmul.bf16.gmra.mxu0 %v206
    %v1295 = vpop.f32.mrf.mxu0
    %v1296 = vadd.f32 0.0, %v1295
    %v1297 = vpop.f32.mrf.mxu0
    %v1298 = vadd.f32 0.0, %v1297
    %1299 = vdwg.mxu0
    %1300 = vmatpush.bf16.msra.mxu0 %v773
    %1301 = vmatpush.bf16.msra.mxu0 %v769
    %1302 = vmatpush.bf16.msra.mxu0 %v765
    %1303 = vmatpush.bf16.msra.mxu0 %v761
    %1304 = vmatpush.bf16.msra.mxu0 %v757
    %1305 = vmatpush.bf16.msra.mxu0 %v753
    %1306 = vmatpush.bf16.msra.mxu0 %v749
    %1307 = vmatpush.bf16.msra.mxu0 %v745
    %1308 = vmatmul.bf16.gmra.mxu0 %v195
    %v1309 = vpop.f32.mrf.mxu0
    %v1310 = vadd.f32 %v1281, %v1309
    %v1311 = vpop.f32.mrf.mxu0
    %v1312 = vadd.f32 %v1283, %v1311
    %1313 = vmatmul.bf16.gmra.mxu0 %v199
    %v1314 = vpop.f32.mrf.mxu0
    %v1315 = vadd.f32 %v1286, %v1314
    %v1316 = vpop.f32.mrf.mxu0
    %v1317 = vadd.f32 %v1288, %v1316
    %1318 = vmatmul.bf16.gmra.mxu0 %v203
    %v1319 = vpop.f32.mrf.mxu0
    %v1320 = vadd.f32 %v1291, %v1319
    %v1321 = vpop.f32.mrf.mxu0
    %v1322 = vadd.f32 %v1293, %v1321
    %1323 = vmatmul.bf16.gmra.mxu0 %v207
    %v1324 = vpop.f32.mrf.mxu0
    %v1325 = vadd.f32 %v1296, %v1324
    %v1326 = vpop.f32.mrf.mxu0
    %v1327 = vadd.f32 %v1298, %v1326
    %1328 = vdwg.mxu0
    %1329 = vmatpush.bf16.msra.mxu0 %v805
    %1330 = vmatpush.bf16.msra.mxu0 %v801
    %1331 = vmatpush.bf16.msra.mxu0 %v797
    %1332 = vmatpush.bf16.msra.mxu0 %v793
    %1333 = vmatpush.bf16.msra.mxu0 %v789
    %1334 = vmatpush.bf16.msra.mxu0 %v785
    %1335 = vmatpush.bf16.msra.mxu0 %v781
    %1336 = vmatpush.bf16.msra.mxu0 %v777
    %1337 = vmatmul.bf16.gmra.mxu0 %v196
    %v1338 = vpop.f32.mrf.mxu0
    %v1339 = vadd.f32 %v1310, %v1338
    %v1340 = vpop.f32.mrf.mxu0
    %v1341 = vadd.f32 %v1312, %v1340
    %1342 = vmatmul.bf16.gmra.mxu0 %v200
    %v1343 = vpop.f32.mrf.mxu0
    %v1344 = vadd.f32 %v1315, %v1343
    %v1345 = vpop.f32.mrf.mxu0
    %v1346 = vadd.f32 %v1317, %v1345
    %1347 = vmatmul.bf16.gmra.mxu0 %v204
    %v1348 = vpop.f32.mrf.mxu0
    %v1349 = vadd.f32 %v1320, %v1348
    %v1350 = vpop.f32.mrf.mxu0
    %v1351 = vadd.f32 %v1322, %v1350
    %1352 = vmatmul.bf16.gmra.mxu0 %v208
    %v1353 = vpop.f32.mrf.mxu0
    %v1354 = vadd.f32 %v1325, %v1353
    %v1355 = vpop.f32.mrf.mxu0
    %v1356 = vadd.f32 %v1327, %v1355
    %1357 = vdwg.mxu0
    %1358 = vmatpush.bf16.msra.mxu0 0
    %1359 = vmatpush.bf16.msra.mxu0 0
    %1360 = vmatpush.bf16.msra.mxu0 0
    %1361 = vmatpush.bf16.msra.mxu0 0
    %1362 = vmatpush.bf16.msra.mxu0 0
    %1363 = vmatpush.bf16.msra.mxu0 0
    %1364 = vmatpush.bf16.msra.mxu0 0
    %1365 = vmatpush.bf16.msra.mxu0 %v809
    %1366 = vmatmul.bf16.gmra.mxu0 %v912
    %v1367 = vpop.f32.mrf.mxu0
    %v1368 = vadd.f32 %v1339, %v1367
    %v1369 = vpop.f32.mrf.mxu0
    %v1370 = vadd.f32 %v1341, %v1369
    %1371 = vmatmul.bf16.gmra.mxu0 %v915
    %v1372 = vpop.f32.mrf.mxu0
    %v1373 = vadd.f32 %v1344, %v1372
    %v1374 = vpop.f32.mrf.mxu0
    %v1375 = vadd.f32 %v1346, %v1374
    %1376 = vmatmul.bf16.gmra.mxu0 %v918
    %v1377 = vpop.f32.mrf.mxu0
    %v1378 = vadd.f32 %v1349, %v1377
    %v1379 = vpop.f32.mrf.mxu0
    %v1380 = vadd.f32 %v1351, %v1379
    %1381 = vmatmul.bf16.gmra.mxu0 %v921
    %v1382 = vpop.f32.mrf.mxu0
    %v1383 = vadd.f32 %v1354, %v1382
    %v1384 = vpop.f32.mrf.mxu0
    %v1385 = vadd.f32 %v1356, %v1384
    %1386 = vdwg.mxu0
    %v1403 = vunpack.c.l.b16 %v114
    %v1404 = vunpack.c.h.b16 %v114
    %v1405 = vunpack.c.l.b16 %v115
    %v1406 = vunpack.c.h.b16 %v115
    %v1407 = vunpack.c.l.b16 %v116
    %v1408 = vunpack.c.h.b16 %v116
    %v1409 = vunpack.c.l.b16 %v117
    %v1410 = vunpack.c.h.b16 %v117
    %v1411 = vunpack.c.l.b16 %v118
    %v1412 = vunpack.c.h.b16 %v118
    %v1413 = vunpack.c.l.b16 %v119
    %v1414 = vunpack.c.h.b16 %v119
    %v1415 = vunpack.c.l.b16 %v120
    %v1416 = vunpack.c.h.b16 %v120
    %v1417 = vunpack.c.l.b16 %v121
    %v1418 = vunpack.c.h.b16 %v121
    %v1419 = vunpack.c.l.b16 %v122
    %v1420 = vunpack.c.h.b16 %v122
    %v1421 = vunpack.c.l.b16 %v123
    %v1422 = vunpack.c.h.b16 %v123
    %v1423 = vunpack.c.l.b16 %v124
    %v1424 = vunpack.c.h.b16 %v124
    %v1425 = vunpack.c.l.b16 %v125
    %v1426 = vunpack.c.h.b16 %v125
    %v1427 = vunpack.c.l.b16 %v126
    %v1428 = vunpack.c.h.b16 %v126
    %v1429 = vunpack.c.l.b16 %v127
    %v1430 = vunpack.c.h.b16 %v127
    %v1431 = vunpack.c.l.b16 %v128
    %v1432 = vunpack.c.h.b16 %v128
    %v1433 = vunpack.c.l.b16 %v129
    %v1434 = vunpack.c.h.b16 %v129
    %v1435 = vpack.c.b16 %v1407, %v1403
    %v1436 = vpack.c.b16 %v1408, %v1404
    %v1437 = vpack.c.b16 %v1409, %v1405
    %v1438 = vpack.c.b16 %v1410, %v1406
    %v1439 = vpack.c.b16 %v1415, %v1411
    %v1440 = vpack.c.b16 %v1416, %v1412
    %v1441 = vpack.c.b16 %v1417, %v1413
    %v1442 = vpack.c.b16 %v1418, %v1414
    %v1443 = vpack.c.b16 %v1423, %v1419
    %v1444 = vpack.c.b16 %v1424, %v1420
    %v1445 = vpack.c.b16 %v1425, %v1421
    %v1446 = vpack.c.b16 %v1426, %v1422
    %v1447 = vpack.c.b16 %v1431, %v1427
    %v1448 = vpack.c.b16 %v1432, %v1428
    %v1449 = vpack.c.b16 %v1433, %v1429
    %v1450 = vpack.c.b16 %v1434, %v1430
    %v1464 = vsel %vm910, %v1438, 0
    %v1467 = vsel %vm910, %v1442, 0
    %v1470 = vsel %vm910, %v1446, 0
    %v1473 = vsel %vm910, %v1450, 0
    %1475 = vmatpush.bf16.msra.mxu0 %v738
    %1476 = vmatpush.bf16.msra.mxu0 %v734
    %1477 = vmatpush.bf16.msra.mxu0 %v730
    %1478 = vmatpush.bf16.msra.mxu0 %v726
    %1479 = vmatpush.bf16.msra.mxu0 %v722
    %1480 = vmatpush.bf16.msra.mxu0 %v718
    %1481 = vmatpush.bf16.msra.mxu0 %v714
    %1482 = vmatpush.bf16.msra.mxu0 %v710
    %1483 = vmatmul.bf16.gmra.mxu0 %v1435
    %v1484 = vpop.f32.mrf.mxu0
    %v1485 = vadd.f32 %v1020, %v1484
    %v1486 = vpop.f32.mrf.mxu0
    %v1487 = vadd.f32 %v1022, %v1486
    %1488 = vmatmul.bf16.gmra.mxu0 %v1439
    %v1489 = vpop.f32.mrf.mxu0
    %v1490 = vadd.f32 %v1025, %v1489
    %v1491 = vpop.f32.mrf.mxu0
    %v1492 = vadd.f32 %v1027, %v1491
    %1493 = vmatmul.bf16.gmra.mxu0 %v1443
    %v1494 = vpop.f32.mrf.mxu0
    %v1495 = vadd.f32 %v1030, %v1494
    %v1496 = vpop.f32.mrf.mxu0
    %v1497 = vadd.f32 %v1032, %v1496
    %1498 = vmatmul.bf16.gmra.mxu0 %v1447
    %v1499 = vpop.f32.mrf.mxu0
    %v1500 = vadd.f32 %v1035, %v1499
    %v1501 = vpop.f32.mrf.mxu0
    %v1502 = vadd.f32 %v1037, %v1501
    %1503 = vdwg.mxu0
    %1504 = vmatpush.bf16.msra.mxu0 %v770
    %1505 = vmatpush.bf16.msra.mxu0 %v766
    %1506 = vmatpush.bf16.msra.mxu0 %v762
    %1507 = vmatpush.bf16.msra.mxu0 %v758
    %1508 = vmatpush.bf16.msra.mxu0 %v754
    %1509 = vmatpush.bf16.msra.mxu0 %v750
    %1510 = vmatpush.bf16.msra.mxu0 %v746
    %1511 = vmatpush.bf16.msra.mxu0 %v742
    %1512 = vmatmul.bf16.gmra.mxu0 %v1436
    %v1513 = vpop.f32.mrf.mxu0
    %v1514 = vadd.f32 %v1485, %v1513
    %v1515 = vpop.f32.mrf.mxu0
    %v1516 = vadd.f32 %v1487, %v1515
    %1517 = vmatmul.bf16.gmra.mxu0 %v1440
    %v1518 = vpop.f32.mrf.mxu0
    %v1519 = vadd.f32 %v1490, %v1518
    %v1520 = vpop.f32.mrf.mxu0
    %v1521 = vadd.f32 %v1492, %v1520
    %1522 = vmatmul.bf16.gmra.mxu0 %v1444
    %v1523 = vpop.f32.mrf.mxu0
    %v1524 = vadd.f32 %v1495, %v1523
    %v1525 = vpop.f32.mrf.mxu0
    %v1526 = vadd.f32 %v1497, %v1525
    %1527 = vmatmul.bf16.gmra.mxu0 %v1448
    %v1528 = vpop.f32.mrf.mxu0
    %v1529 = vadd.f32 %v1500, %v1528
    %v1530 = vpop.f32.mrf.mxu0
    %v1531 = vadd.f32 %v1502, %v1530
    %1532 = vdwg.mxu0
    %1533 = vmatpush.bf16.msra.mxu0 %v802
    %1534 = vmatpush.bf16.msra.mxu0 %v798
    %1535 = vmatpush.bf16.msra.mxu0 %v794
    %1536 = vmatpush.bf16.msra.mxu0 %v790
    %1537 = vmatpush.bf16.msra.mxu0 %v786
    %1538 = vmatpush.bf16.msra.mxu0 %v782
    %1539 = vmatpush.bf16.msra.mxu0 %v778
    %1540 = vmatpush.bf16.msra.mxu0 %v774
    %1541 = vmatmul.bf16.gmra.mxu0 %v1437
    %v1542 = vpop.f32.mrf.mxu0
    %v1543 = vadd.f32 %v1514, %v1542
    %v1544 = vpop.f32.mrf.mxu0
    %v1545 = vadd.f32 %v1516, %v1544
    %1546 = vmatmul.bf16.gmra.mxu0 %v1441
    %v1547 = vpop.f32.mrf.mxu0
    %v1548 = vadd.f32 %v1519, %v1547
    %v1549 = vpop.f32.mrf.mxu0
    %v1550 = vadd.f32 %v1521, %v1549
    %1551 = vmatmul.bf16.gmra.mxu0 %v1445
    %v1552 = vpop.f32.mrf.mxu0
    %v1553 = vadd.f32 %v1524, %v1552
    %v1554 = vpop.f32.mrf.mxu0
    %v1555 = vadd.f32 %v1526, %v1554
    %1556 = vmatmul.bf16.gmra.mxu0 %v1449
    %v1557 = vpop.f32.mrf.mxu0
    %v1558 = vadd.f32 %v1529, %v1557
    %v1559 = vpop.f32.mrf.mxu0
    %v1560 = vadd.f32 %v1531, %v1559
    %1561 = vdwg.mxu0
    %1562 = vmatpush.bf16.msra.mxu0 0
    %1563 = vmatpush.bf16.msra.mxu0 0
    %1564 = vmatpush.bf16.msra.mxu0 0
    %1565 = vmatpush.bf16.msra.mxu0 0
    %1566 = vmatpush.bf16.msra.mxu0 0
    %1567 = vmatpush.bf16.msra.mxu0 0
    %1568 = vmatpush.bf16.msra.mxu0 0
    %1569 = vmatpush.bf16.msra.mxu0 %v806
    %1570 = vmatmul.bf16.gmra.mxu0 %v1464
    %v1571 = vpop.f32.mrf.mxu0
    %v1572 = vadd.f32 %v1543, %v1571
    %v1573 = vpop.f32.mrf.mxu0
    %v1574 = vadd.f32 %v1545, %v1573
    %1575 = vmatmul.bf16.gmra.mxu0 %v1467
    %v1576 = vpop.f32.mrf.mxu0
    %v1577 = vadd.f32 %v1548, %v1576
    %v1578 = vpop.f32.mrf.mxu0
    %v1579 = vadd.f32 %v1550, %v1578
    %1580 = vmatmul.bf16.gmra.mxu0 %v1470
    %v1581 = vpop.f32.mrf.mxu0
    %v1582 = vadd.f32 %v1553, %v1581
    %v1583 = vpop.f32.mrf.mxu0
    %v1584 = vadd.f32 %v1555, %v1583
    %1585 = vmatmul.bf16.gmra.mxu0 %v1473
    %v1586 = vpop.f32.mrf.mxu0
    %v1587 = vadd.f32 %v1558, %v1586
    %v1588 = vpop.f32.mrf.mxu0
    %v1589 = vadd.f32 %v1560, %v1588
    %1590 = vdwg.mxu0
    %1591 = vmatpush.bf16.msra.mxu0 %v739
    %1592 = vmatpush.bf16.msra.mxu0 %v735
    %1593 = vmatpush.bf16.msra.mxu0 %v731
    %1594 = vmatpush.bf16.msra.mxu0 %v727
    %1595 = vmatpush.bf16.msra.mxu0 %v723
    %1596 = vmatpush.bf16.msra.mxu0 %v719
    %1597 = vmatpush.bf16.msra.mxu0 %v715
    %1598 = vmatpush.bf16.msra.mxu0 %v711
    %1599 = vmatmul.bf16.gmra.mxu0 %v1435
    %v1600 = vpop.f32.mrf.mxu0
    %v1601 = vadd.f32 %v1136, %v1600
    %v1602 = vpop.f32.mrf.mxu0
    %v1603 = vadd.f32 %v1138, %v1602
    %1604 = vmatmul.bf16.gmra.mxu0 %v1439
    %v1605 = vpop.f32.mrf.mxu0
    %v1606 = vadd.f32 %v1141, %v1605
    %v1607 = vpop.f32.mrf.mxu0
    %v1608 = vadd.f32 %v1143, %v1607
    %1609 = vmatmul.bf16.gmra.mxu0 %v1443
    %v1610 = vpop.f32.mrf.mxu0
    %v1611 = vadd.f32 %v1146, %v1610
    %v1612 = vpop.f32.mrf.mxu0
    %v1613 = vadd.f32 %v1148, %v1612
    %1614 = vmatmul.bf16.gmra.mxu0 %v1447
    %v1615 = vpop.f32.mrf.mxu0
    %v1616 = vadd.f32 %v1151, %v1615
    %v1617 = vpop.f32.mrf.mxu0
    %v1618 = vadd.f32 %v1153, %v1617
    %1619 = vdwg.mxu0
    %1620 = vmatpush.bf16.msra.mxu0 %v771
    %1621 = vmatpush.bf16.msra.mxu0 %v767
    %1622 = vmatpush.bf16.msra.mxu0 %v763
    %1623 = vmatpush.bf16.msra.mxu0 %v759
    %1624 = vmatpush.bf16.msra.mxu0 %v755
    %1625 = vmatpush.bf16.msra.mxu0 %v751
    %1626 = vmatpush.bf16.msra.mxu0 %v747
    %1627 = vmatpush.bf16.msra.mxu0 %v743
    %1628 = vmatmul.bf16.gmra.mxu0 %v1436
    %v1629 = vpop.f32.mrf.mxu0
    %v1630 = vadd.f32 %v1601, %v1629
    %v1631 = vpop.f32.mrf.mxu0
    %v1632 = vadd.f32 %v1603, %v1631
    %1633 = vmatmul.bf16.gmra.mxu0 %v1440
    %v1634 = vpop.f32.mrf.mxu0
    %v1635 = vadd.f32 %v1606, %v1634
    %v1636 = vpop.f32.mrf.mxu0
    %v1637 = vadd.f32 %v1608, %v1636
    %1638 = vmatmul.bf16.gmra.mxu0 %v1444
    %v1639 = vpop.f32.mrf.mxu0
    %v1640 = vadd.f32 %v1611, %v1639
    %v1641 = vpop.f32.mrf.mxu0
    %v1642 = vadd.f32 %v1613, %v1641
    %1643 = vmatmul.bf16.gmra.mxu0 %v1448
    %v1644 = vpop.f32.mrf.mxu0
    %v1645 = vadd.f32 %v1616, %v1644
    %v1646 = vpop.f32.mrf.mxu0
    %v1647 = vadd.f32 %v1618, %v1646
    %1648 = vdwg.mxu0
    %1649 = vmatpush.bf16.msra.mxu0 %v803
    %1650 = vmatpush.bf16.msra.mxu0 %v799
    %1651 = vmatpush.bf16.msra.mxu0 %v795
    %1652 = vmatpush.bf16.msra.mxu0 %v791
    %1653 = vmatpush.bf16.msra.mxu0 %v787
    %1654 = vmatpush.bf16.msra.mxu0 %v783
    %1655 = vmatpush.bf16.msra.mxu0 %v779
    %1656 = vmatpush.bf16.msra.mxu0 %v775
    %1657 = vmatmul.bf16.gmra.mxu0 %v1437
    %v1658 = vpop.f32.mrf.mxu0
    %v1659 = vadd.f32 %v1630, %v1658
    %v1660 = vpop.f32.mrf.mxu0
    %v1661 = vadd.f32 %v1632, %v1660
    %1662 = vmatmul.bf16.gmra.mxu0 %v1441
    %v1663 = vpop.f32.mrf.mxu0
    %v1664 = vadd.f32 %v1635, %v1663
    %v1665 = vpop.f32.mrf.mxu0
    %v1666 = vadd.f32 %v1637, %v1665
    %1667 = vmatmul.bf16.gmra.mxu0 %v1445
    %v1668 = vpop.f32.mrf.mxu0
    %v1669 = vadd.f32 %v1640, %v1668
    %v1670 = vpop.f32.mrf.mxu0
    %v1671 = vadd.f32 %v1642, %v1670
    %1672 = vmatmul.bf16.gmra.mxu0 %v1449
    %v1673 = vpop.f32.mrf.mxu0
    %v1674 = vadd.f32 %v1645, %v1673
    %v1675 = vpop.f32.mrf.mxu0
    %v1676 = vadd.f32 %v1647, %v1675
    %1677 = vdwg.mxu0
    %1678 = vmatpush.bf16.msra.mxu0 0
    %1679 = vmatpush.bf16.msra.mxu0 0
    %1680 = vmatpush.bf16.msra.mxu0 0
    %1681 = vmatpush.bf16.msra.mxu0 0
    %1682 = vmatpush.bf16.msra.mxu0 0
    %1683 = vmatpush.bf16.msra.mxu0 0
    %1684 = vmatpush.bf16.msra.mxu0 0
    %1685 = vmatpush.bf16.msra.mxu0 %v807
    %1686 = vmatmul.bf16.gmra.mxu0 %v1464
    %v1687 = vpop.f32.mrf.mxu0
    %v1688 = vadd.f32 %v1659, %v1687
    %v1689 = vpop.f32.mrf.mxu0
    %v1690 = vadd.f32 %v1661, %v1689
    %1691 = vmatmul.bf16.gmra.mxu0 %v1467
    %v1692 = vpop.f32.mrf.mxu0
    %v1693 = vadd.f32 %v1664, %v1692
    %v1694 = vpop.f32.mrf.mxu0
    %v1695 = vadd.f32 %v1666, %v1694
    %1696 = vmatmul.bf16.gmra.mxu0 %v1470
    %v1697 = vpop.f32.mrf.mxu0
    %v1698 = vadd.f32 %v1669, %v1697
    %v1699 = vpop.f32.mrf.mxu0
    %v1700 = vadd.f32 %v1671, %v1699
    %1701 = vmatmul.bf16.gmra.mxu0 %v1473
    %v1702 = vpop.f32.mrf.mxu0
    %v1703 = vadd.f32 %v1674, %v1702
    %v1704 = vpop.f32.mrf.mxu0
    %v1705 = vadd.f32 %v1676, %v1704
    %1706 = vdwg.mxu0
    %1707 = vmatpush.bf16.msra.mxu0 %v740
    %1708 = vmatpush.bf16.msra.mxu0 %v736
    %1709 = vmatpush.bf16.msra.mxu0 %v732
    %1710 = vmatpush.bf16.msra.mxu0 %v728
    %1711 = vmatpush.bf16.msra.mxu0 %v724
    %1712 = vmatpush.bf16.msra.mxu0 %v720
    %1713 = vmatpush.bf16.msra.mxu0 %v716
    %1714 = vmatpush.bf16.msra.mxu0 %v712
    %1715 = vmatmul.bf16.gmra.mxu0 %v1435
    %v1716 = vpop.f32.mrf.mxu0
    %v1717 = vadd.f32 %v1252, %v1716
    %v1718 = vpop.f32.mrf.mxu0
    %v1719 = vadd.f32 %v1254, %v1718
    %1720 = vmatmul.bf16.gmra.mxu0 %v1439
    %v1721 = vpop.f32.mrf.mxu0
    %v1722 = vadd.f32 %v1257, %v1721
    %v1723 = vpop.f32.mrf.mxu0
    %v1724 = vadd.f32 %v1259, %v1723
    %1725 = vmatmul.bf16.gmra.mxu0 %v1443
    %v1726 = vpop.f32.mrf.mxu0
    %v1727 = vadd.f32 %v1262, %v1726
    %v1728 = vpop.f32.mrf.mxu0
    %v1729 = vadd.f32 %v1264, %v1728
    %1730 = vmatmul.bf16.gmra.mxu0 %v1447
    %v1731 = vpop.f32.mrf.mxu0
    %v1732 = vadd.f32 %v1267, %v1731
    %v1733 = vpop.f32.mrf.mxu0
    %v1734 = vadd.f32 %v1269, %v1733
    %1735 = vdwg.mxu0
    %1736 = vmatpush.bf16.msra.mxu0 %v772
    %1737 = vmatpush.bf16.msra.mxu0 %v768
    %1738 = vmatpush.bf16.msra.mxu0 %v764
    %1739 = vmatpush.bf16.msra.mxu0 %v760
    %1740 = vmatpush.bf16.msra.mxu0 %v756
    %1741 = vmatpush.bf16.msra.mxu0 %v752
    %1742 = vmatpush.bf16.msra.mxu0 %v748
    %1743 = vmatpush.bf16.msra.mxu0 %v744
    %1744 = vmatmul.bf16.gmra.mxu0 %v1436
    %v1745 = vpop.f32.mrf.mxu0
    %v1746 = vadd.f32 %v1717, %v1745
    %v1747 = vpop.f32.mrf.mxu0
    %v1748 = vadd.f32 %v1719, %v1747
    %1749 = vmatmul.bf16.gmra.mxu0 %v1440
    %v1750 = vpop.f32.mrf.mxu0
    %v1751 = vadd.f32 %v1722, %v1750
    %v1752 = vpop.f32.mrf.mxu0
    %v1753 = vadd.f32 %v1724, %v1752
    %1754 = vmatmul.bf16.gmra.mxu0 %v1444
    %v1755 = vpop.f32.mrf.mxu0
    %v1756 = vadd.f32 %v1727, %v1755
    %v1757 = vpop.f32.mrf.mxu0
    %v1758 = vadd.f32 %v1729, %v1757
    %1759 = vmatmul.bf16.gmra.mxu0 %v1448
    %v1760 = vpop.f32.mrf.mxu0
    %v1761 = vadd.f32 %v1732, %v1760
    %v1762 = vpop.f32.mrf.mxu0
    %v1763 = vadd.f32 %v1734, %v1762
    %1764 = vdwg.mxu0
    %1765 = vmatpush.bf16.msra.mxu0 %v804
    %1766 = vmatpush.bf16.msra.mxu0 %v800
    %1767 = vmatpush.bf16.msra.mxu0 %v796
    %1768 = vmatpush.bf16.msra.mxu0 %v792
    %1769 = vmatpush.bf16.msra.mxu0 %v788
    %1770 = vmatpush.bf16.msra.mxu0 %v784
    %1771 = vmatpush.bf16.msra.mxu0 %v780
    %1772 = vmatpush.bf16.msra.mxu0 %v776
    %1773 = vmatmul.bf16.gmra.mxu0 %v1437
    %v1774 = vpop.f32.mrf.mxu0
    %v1775 = vadd.f32 %v1746, %v1774
    %v1776 = vpop.f32.mrf.mxu0
    %v1777 = vadd.f32 %v1748, %v1776
    %1778 = vmatmul.bf16.gmra.mxu0 %v1441
    %v1779 = vpop.f32.mrf.mxu0
    %v1780 = vadd.f32 %v1751, %v1779
    %v1781 = vpop.f32.mrf.mxu0
    %v1782 = vadd.f32 %v1753, %v1781
    %1783 = vmatmul.bf16.gmra.mxu0 %v1445
    %v1784 = vpop.f32.mrf.mxu0
    %v1785 = vadd.f32 %v1756, %v1784
    %v1786 = vpop.f32.mrf.mxu0
    %v1787 = vadd.f32 %v1758, %v1786
    %1788 = vmatmul.bf16.gmra.mxu0 %v1449
    %v1789 = vpop.f32.mrf.mxu0
    %v1790 = vadd.f32 %v1761, %v1789
    %v1791 = vpop.f32.mrf.mxu0
    %v1792 = vadd.f32 %v1763, %v1791
    %1793 = vdwg.mxu0
    %1794 = vmatpush.bf16.msra.mxu0 0
    %1795 = vmatpush.bf16.msra.mxu0 0
    %1796 = vmatpush.bf16.msra.mxu0 0
    %1797 = vmatpush.bf16.msra.mxu0 0
    %1798 = vmatpush.bf16.msra.mxu0 0
    %1799 = vmatpush.bf16.msra.mxu0 0
    %1800 = vmatpush.bf16.msra.mxu0 0
    %1801 = vmatpush.bf16.msra.mxu0 %v808
    %1802 = vmatmul.bf16.gmra.mxu0 %v1464
    %v1803 = vpop.f32.mrf.mxu0
    %v1804 = vadd.f32 %v1775, %v1803
    %v1805 = vpop.f32.mrf.mxu0
    %v1806 = vadd.f32 %v1777, %v1805
    %1807 = vmatmul.bf16.gmra.mxu0 %v1467
    %v1808 = vpop.f32.mrf.mxu0
    %v1809 = vadd.f32 %v1780, %v1808
    %v1810 = vpop.f32.mrf.mxu0
    %v1811 = vadd.f32 %v1782, %v1810
    %1812 = vmatmul.bf16.gmra.mxu0 %v1470
    %v1813 = vpop.f32.mrf.mxu0
    %v1814 = vadd.f32 %v1785, %v1813
    %v1815 = vpop.f32.mrf.mxu0
    %v1816 = vadd.f32 %v1787, %v1815
    %1817 = vmatmul.bf16.gmra.mxu0 %v1473
    %v1818 = vpop.f32.mrf.mxu0
    %v1819 = vadd.f32 %v1790, %v1818
    %v1820 = vpop.f32.mrf.mxu0
    %v1821 = vadd.f32 %v1792, %v1820
    %1822 = vdwg.mxu0
    %1823 = vmatpush.bf16.msra.mxu0 %v741
    %1824 = vmatpush.bf16.msra.mxu0 %v737
    %1825 = vmatpush.bf16.msra.mxu0 %v733
    %1826 = vmatpush.bf16.msra.mxu0 %v729
    %1827 = vmatpush.bf16.msra.mxu0 %v725
    %1828 = vmatpush.bf16.msra.mxu0 %v721
    %1829 = vmatpush.bf16.msra.mxu0 %v717
    %1830 = vmatpush.bf16.msra.mxu0 %v713
    %1831 = vmatmul.bf16.gmra.mxu0 %v1435
    %v1832 = vpop.f32.mrf.mxu0
    %v1833 = vadd.f32 %v1368, %v1832
    %v1834 = vpop.f32.mrf.mxu0
    %v1835 = vadd.f32 %v1370, %v1834
    %1836 = vmatmul.bf16.gmra.mxu0 %v1439
    %v1837 = vpop.f32.mrf.mxu0
    %v1838 = vadd.f32 %v1373, %v1837
    %v1839 = vpop.f32.mrf.mxu0
    %v1840 = vadd.f32 %v1375, %v1839
    %1841 = vmatmul.bf16.gmra.mxu0 %v1443
    %v1842 = vpop.f32.mrf.mxu0
    %v1843 = vadd.f32 %v1378, %v1842
    %v1844 = vpop.f32.mrf.mxu0
    %v1845 = vadd.f32 %v1380, %v1844
    %1846 = vmatmul.bf16.gmra.mxu0 %v1447
    %v1847 = vpop.f32.mrf.mxu0
    %v1848 = vadd.f32 %v1383, %v1847
    %v1849 = vpop.f32.mrf.mxu0
    %v1850 = vadd.f32 %v1385, %v1849
    %1851 = vdwg.mxu0
    %1852 = vmatpush.bf16.msra.mxu0 %v773
    %1853 = vmatpush.bf16.msra.mxu0 %v769
    %1854 = vmatpush.bf16.msra.mxu0 %v765
    %1855 = vmatpush.bf16.msra.mxu0 %v761
    %1856 = vmatpush.bf16.msra.mxu0 %v757
    %1857 = vmatpush.bf16.msra.mxu0 %v753
    %1858 = vmatpush.bf16.msra.mxu0 %v749
    %1859 = vmatpush.bf16.msra.mxu0 %v745
    %1860 = vmatmul.bf16.gmra.mxu0 %v1436
    %v1861 = vpop.f32.mrf.mxu0
    %v1862 = vadd.f32 %v1833, %v1861
    %v1863 = vpop.f32.mrf.mxu0
    %v1864 = vadd.f32 %v1835, %v1863
    %1865 = vmatmul.bf16.gmra.mxu0 %v1440
    %v1866 = vpop.f32.mrf.mxu0
    %v1867 = vadd.f32 %v1838, %v1866
    %v1868 = vpop.f32.mrf.mxu0
    %v1869 = vadd.f32 %v1840, %v1868
    %1870 = vmatmul.bf16.gmra.mxu0 %v1444
    %v1871 = vpop.f32.mrf.mxu0
    %v1872 = vadd.f32 %v1843, %v1871
    %v1873 = vpop.f32.mrf.mxu0
    %v1874 = vadd.f32 %v1845, %v1873
    %1875 = vmatmul.bf16.gmra.mxu0 %v1448
    %v1876 = vpop.f32.mrf.mxu0
    %v1877 = vadd.f32 %v1848, %v1876
    %v1878 = vpop.f32.mrf.mxu0
    %v1879 = vadd.f32 %v1850, %v1878
    %1880 = vdwg.mxu0
    %1881 = vmatpush.bf16.msra.mxu0 %v805
    %1882 = vmatpush.bf16.msra.mxu0 %v801
    %1883 = vmatpush.bf16.msra.mxu0 %v797
    %1884 = vmatpush.bf16.msra.mxu0 %v793
    %1885 = vmatpush.bf16.msra.mxu0 %v789
    %1886 = vmatpush.bf16.msra.mxu0 %v785
    %1887 = vmatpush.bf16.msra.mxu0 %v781
    %1888 = vmatpush.bf16.msra.mxu0 %v777
    %1889 = vmatmul.bf16.gmra.mxu0 %v1437
    %v1890 = vpop.f32.mrf.mxu0
    %v1891 = vadd.f32 %v1862, %v1890
    %v1892 = vpop.f32.mrf.mxu0
    %v1893 = vadd.f32 %v1864, %v1892
    %1894 = vmatmul.bf16.gmra.mxu0 %v1441
    %v1895 = vpop.f32.mrf.mxu0
    %v1896 = vadd.f32 %v1867, %v1895
    %v1897 = vpop.f32.mrf.mxu0
    %v1898 = vadd.f32 %v1869, %v1897
    %1899 = vmatmul.bf16.gmra.mxu0 %v1445
    %v1900 = vpop.f32.mrf.mxu0
    %v1901 = vadd.f32 %v1872, %v1900
    %v1902 = vpop.f32.mrf.mxu0
    %v1903 = vadd.f32 %v1874, %v1902
    %1904 = vmatmul.bf16.gmra.mxu0 %v1449
    %v1905 = vpop.f32.mrf.mxu0
    %v1906 = vadd.f32 %v1877, %v1905
    %v1907 = vpop.f32.mrf.mxu0
    %v1908 = vadd.f32 %v1879, %v1907
    %1909 = vdwg.mxu0
    %1910 = vmatpush.bf16.msra.mxu0 0
    %1911 = vmatpush.bf16.msra.mxu0 0
    %1912 = vmatpush.bf16.msra.mxu0 0
    %1913 = vmatpush.bf16.msra.mxu0 0
    %1914 = vmatpush.bf16.msra.mxu0 0
    %1915 = vmatpush.bf16.msra.mxu0 0
    %1916 = vmatpush.bf16.msra.mxu0 0
    %1917 = vmatpush.bf16.msra.mxu0 %v809
    %1918 = vmatmul.bf16.gmra.mxu0 %v1464
    %v1919 = vpop.f32.mrf.mxu0
    %v1920 = vadd.f32 %v1891, %v1919
    %v1921 = vpop.f32.mrf.mxu0
    %v1922 = vadd.f32 %v1893, %v1921
    %1923 = vmatmul.bf16.gmra.mxu0 %v1467
    %v1924 = vpop.f32.mrf.mxu0
    %v1925 = vadd.f32 %v1896, %v1924
    %v1926 = vpop.f32.mrf.mxu0
    %v1927 = vadd.f32 %v1898, %v1926
    %1928 = vmatmul.bf16.gmra.mxu0 %v1470
    %v1929 = vpop.f32.mrf.mxu0
    %v1930 = vadd.f32 %v1901, %v1929
    %v1931 = vpop.f32.mrf.mxu0
    %v1932 = vadd.f32 %v1903, %v1931
    %1933 = vmatmul.bf16.gmra.mxu0 %v1473
    %v1934 = vpop.f32.mrf.mxu0
    %v1935 = vadd.f32 %v1906, %v1934
    %v1936 = vpop.f32.mrf.mxu0
    %v1937 = vadd.f32 %v1908, %v1936
    %1938 = vdwg.mxu0
    %v2039 = vunpack.c.l.b16 %v310
    %v2040 = vunpack.c.h.b16 %v310
    %v2041 = vunpack.c.l.b16 %v311
    %v2042 = vunpack.c.h.b16 %v311
    %v2043 = vunpack.c.l.b16 %v312
    %v2044 = vunpack.c.h.b16 %v312
    %v2045 = vunpack.c.l.b16 %v313
    %v2046 = vunpack.c.h.b16 %v313
    %v2047 = vunpack.c.l.b16 %v314
    %v2048 = vunpack.c.h.b16 %v314
    %v2049 = vunpack.c.l.b16 %v315
    %v2050 = vunpack.c.h.b16 %v315
    %v2051 = vunpack.c.l.b16 %v316
    %v2052 = vunpack.c.h.b16 %v316
    %v2053 = vunpack.c.l.b16 %v317
    %v2054 = vunpack.c.h.b16 %v317
    %v2055 = vunpack.c.l.b16 %v318
    %v2056 = vunpack.c.h.b16 %v318
    %v2057 = vunpack.c.l.b16 %v319
    %v2058 = vunpack.c.h.b16 %v319
    %v2059 = vunpack.c.l.b16 %v320
    %v2060 = vunpack.c.h.b16 %v320
    %v2061 = vunpack.c.l.b16 %v321
    %v2062 = vunpack.c.h.b16 %v321
    %v2063 = vunpack.c.l.b16 %v322
    %v2064 = vunpack.c.h.b16 %v322
    %v2065 = vunpack.c.l.b16 %v323
    %v2066 = vunpack.c.h.b16 %v323
    %v2067 = vunpack.c.l.b16 %v324
    %v2068 = vunpack.c.h.b16 %v324
    %v2069 = vunpack.c.l.b16 %v325
    %v2070 = vunpack.c.h.b16 %v325
    %v2071 = vunpack.c.l.b16 %v326
    %v2072 = vunpack.c.h.b16 %v326
    %v2073 = vunpack.c.l.b16 %v327
    %v2074 = vunpack.c.h.b16 %v327
    %v2075 = vunpack.c.l.b16 %v328
    %v2076 = vunpack.c.h.b16 %v328
    %v2077 = vunpack.c.l.b16 %v329
    %v2078 = vunpack.c.h.b16 %v329
    %v2079 = vunpack.c.l.b16 %v330
    %v2080 = vunpack.c.h.b16 %v330
    %v2081 = vunpack.c.l.b16 %v331
    %v2082 = vunpack.c.h.b16 %v331
    %v2083 = vunpack.c.l.b16 %v332
    %v2084 = vunpack.c.h.b16 %v332
    %v2085 = vunpack.c.l.b16 %v333
    %v2086 = vunpack.c.h.b16 %v333
    %v2087 = vunpack.c.l.b16 %v334
    %v2088 = vunpack.c.h.b16 %v334
    %v2089 = vunpack.c.l.b16 %v335
    %v2090 = vunpack.c.h.b16 %v335
    %v2091 = vunpack.c.l.b16 %v336
    %v2092 = vunpack.c.h.b16 %v336
    %v2093 = vunpack.c.l.b16 %v337
    %v2094 = vunpack.c.h.b16 %v337
    %v2095 = vunpack.c.l.b16 %v338
    %v2096 = vunpack.c.h.b16 %v338
    %v2097 = vunpack.c.l.b16 %v339
    %v2098 = vunpack.c.h.b16 %v339
    %v2099 = vunpack.c.l.b16 %v340
    %v2100 = vunpack.c.h.b16 %v340
    %v2101 = vunpack.c.l.b16 %v341
    %v2102 = vunpack.c.h.b16 %v341
    %v2103 = vunpack.c.l.b16 %v342
    %v2104 = vunpack.c.h.b16 %v342
    %v2105 = vunpack.c.l.b16 %v343
    %v2106 = vunpack.c.h.b16 %v343
    %v2107 = vunpack.c.l.b16 %v344
    %v2108 = vunpack.c.h.b16 %v344
    %v2109 = vunpack.c.l.b16 %v345
    %v2110 = vunpack.c.h.b16 %v345
    %v2111 = vunpack.c.l.b16 %v346
    %v2112 = vunpack.c.h.b16 %v346
    %v2113 = vunpack.c.l.b16 %v347
    %v2114 = vunpack.c.h.b16 %v347
    %v2115 = vunpack.c.l.b16 %v348
    %v2116 = vunpack.c.h.b16 %v348
    %v2117 = vunpack.c.l.b16 %v349
    %v2118 = vunpack.c.h.b16 %v349
    %v2119 = vunpack.c.l.b16 %v350
    %v2120 = vunpack.c.h.b16 %v350
    %v2121 = vunpack.c.l.b16 %v351
    %v2122 = vunpack.c.h.b16 %v351
    %v2123 = vunpack.c.l.b16 %v352
    %v2124 = vunpack.c.h.b16 %v352
    %v2125 = vunpack.c.l.b16 %v353
    %v2126 = vunpack.c.h.b16 %v353
    %v2127 = vunpack.c.l.b16 %v354
    %v2128 = vunpack.c.h.b16 %v354
    %v2129 = vunpack.c.l.b16 %v355
    %v2130 = vunpack.c.h.b16 %v355
    %v2131 = vunpack.c.l.b16 %v356
    %v2132 = vunpack.c.h.b16 %v356
    %v2133 = vunpack.c.l.b16 %v357
    %v2134 = vunpack.c.h.b16 %v357
    %v2135 = vunpack.c.l.b16 %v358
    %v2136 = vunpack.c.h.b16 %v358
    %v2137 = vunpack.c.l.b16 %v359
    %v2138 = vunpack.c.h.b16 %v359
    %v2139 = vunpack.c.l.b16 %v360
    %v2140 = vunpack.c.h.b16 %v360
    %v2141 = vunpack.c.l.b16 %v361
    %v2142 = vunpack.c.h.b16 %v361
    %v2143 = vunpack.c.l.b16 %v362
    %v2144 = vunpack.c.h.b16 %v362
    %v2145 = vunpack.c.l.b16 %v363
    %v2146 = vunpack.c.h.b16 %v363
    %v2147 = vunpack.c.l.b16 %v364
    %v2148 = vunpack.c.h.b16 %v364
    %v2149 = vunpack.c.l.b16 %v365
    %v2150 = vunpack.c.h.b16 %v365
    %v2151 = vunpack.c.l.b16 %v366
    %v2152 = vunpack.c.h.b16 %v366
    %v2153 = vunpack.c.l.b16 %v367
    %v2154 = vunpack.c.h.b16 %v367
    %v2155 = vunpack.c.l.b16 %v368
    %v2156 = vunpack.c.h.b16 %v368
    %v2157 = vunpack.c.l.b16 %v369
    %v2158 = vunpack.c.h.b16 %v369
    %v2159 = vunpack.c.l.b16 %v370
    %v2160 = vunpack.c.h.b16 %v370
    %v2161 = vunpack.c.l.b16 %v371
    %v2162 = vunpack.c.h.b16 %v371
    %v2163 = vunpack.c.l.b16 %v372
    %v2164 = vunpack.c.h.b16 %v372
    %v2165 = vunpack.c.l.b16 %v373
    %v2166 = vunpack.c.h.b16 %v373
    %v2167 = vunpack.c.l.b16 %v374
    %v2168 = vunpack.c.h.b16 %v374
    %v2169 = vunpack.c.l.b16 %v375
    %v2170 = vunpack.c.h.b16 %v375
    %v2171 = vunpack.c.l.b16 %v376
    %v2172 = vunpack.c.h.b16 %v376
    %v2173 = vunpack.c.l.b16 %v377
    %v2174 = vunpack.c.h.b16 %v377
    %v2175 = vunpack.c.l.b16 %v378
    %v2176 = vunpack.c.h.b16 %v378
    %v2177 = vunpack.c.l.b16 %v379
    %v2178 = vunpack.c.h.b16 %v379
    %v2179 = vunpack.c.l.b16 %v380
    %v2180 = vunpack.c.h.b16 %v380
    %v2181 = vunpack.c.l.b16 %v381
    %v2182 = vunpack.c.h.b16 %v381
    %v2183 = vunpack.c.l.b16 %v382
    %v2184 = vunpack.c.h.b16 %v382
    %v2185 = vunpack.c.l.b16 %v383
    %v2186 = vunpack.c.h.b16 %v383
    %v2187 = vunpack.c.l.b16 %v384
    %v2188 = vunpack.c.h.b16 %v384
    %v2189 = vunpack.c.l.b16 %v385
    %v2190 = vunpack.c.h.b16 %v385
    %v2191 = vunpack.c.l.b16 %v386
    %v2192 = vunpack.c.h.b16 %v386
    %v2193 = vunpack.c.l.b16 %v387
    %v2194 = vunpack.c.h.b16 %v387
    %v2195 = vunpack.c.l.b16 %v388
    %v2196 = vunpack.c.h.b16 %v388
    %v2197 = vunpack.c.l.b16 %v389
    %v2198 = vunpack.c.h.b16 %v389
    %v2199 = vunpack.c.l.b16 %v390
    %v2200 = vunpack.c.h.b16 %v390
    %v2201 = vunpack.c.l.b16 %v391
    %v2202 = vunpack.c.h.b16 %v391
    %v2203 = vunpack.c.l.b16 %v392
    %v2204 = vunpack.c.h.b16 %v392
    %v2205 = vunpack.c.l.b16 %v393
    %v2206 = vunpack.c.h.b16 %v393
    %v2207 = vunpack.c.l.b16 %v394
    %v2208 = vunpack.c.h.b16 %v394
    %v2209 = vunpack.c.l.b16 %v395
    %v2210 = vunpack.c.h.b16 %v395
    %v2211 = vunpack.c.l.b16 %v396
    %v2212 = vunpack.c.h.b16 %v396
    %v2213 = vunpack.c.l.b16 %v397
    %v2214 = vunpack.c.h.b16 %v397
    %v2215 = vunpack.c.l.b16 %v398
    %v2216 = vunpack.c.h.b16 %v398
    %v2217 = vunpack.c.l.b16 %v399
    %v2218 = vunpack.c.h.b16 %v399
    %v2219 = vunpack.c.l.b16 %v400
    %v2220 = vunpack.c.h.b16 %v400
    %v2221 = vunpack.c.l.b16 %v401
    %v2222 = vunpack.c.h.b16 %v401
    %v2223 = vunpack.c.l.b16 %v402
    %v2224 = vunpack.c.h.b16 %v402
    %v2225 = vunpack.c.l.b16 %v403
    %v2226 = vunpack.c.h.b16 %v403
    %v2227 = vunpack.c.l.b16 %v404
    %v2228 = vunpack.c.h.b16 %v404
    %v2229 = vunpack.c.l.b16 %v405
    %v2230 = vunpack.c.h.b16 %v405
    %v2231 = vunpack.c.l.b16 %v406
    %v2232 = vunpack.c.h.b16 %v406
    %v2233 = vunpack.c.l.b16 %v407
    %v2234 = vunpack.c.h.b16 %v407
    %v2235 = vunpack.c.l.b16 %v408
    %v2236 = vunpack.c.h.b16 %v408
    %v2237 = vunpack.c.l.b16 %v409
    %v2238 = vunpack.c.h.b16 %v409
    %v2239 = vpack.c.b16 %v2043, %v2039
    %v2240 = vpack.c.b16 %v2044, %v2040
    %v2241 = vpack.c.b16 %v2045, %v2041
    %v2242 = vpack.c.b16 %v2046, %v2042
    %v2243 = vpack.c.b16 %v2051, %v2047
    %v2244 = vpack.c.b16 %v2052, %v2048
    %v2245 = vpack.c.b16 %v2053, %v2049
    %v2246 = vpack.c.b16 %v2054, %v2050
    %v2247 = vpack.c.b16 %v2059, %v2055
    %v2248 = vpack.c.b16 %v2060, %v2056
    %v2249 = vpack.c.b16 %v2061, %v2057
    %v2250 = vpack.c.b16 %v2062, %v2058
    %v2251 = vpack.c.b16 %v2067, %v2063
    %v2252 = vpack.c.b16 %v2068, %v2064
    %v2253 = vpack.c.b16 %v2069, %v2065
    %v2254 = vpack.c.b16 %v2070, %v2066
    %v2255 = vpack.c.b16 %v2075, %v2071
    %v2256 = vpack.c.b16 %v2076, %v2072
    %v2257 = vpack.c.b16 %v2077, %v2073
    %v2258 = vpack.c.b16 %v2078, %v2074
    %v2259 = vpack.c.b16 %v2083, %v2079
    %v2260 = vpack.c.b16 %v2084, %v2080
    %v2261 = vpack.c.b16 %v2085, %v2081
    %v2262 = vpack.c.b16 %v2086, %v2082
    %v2263 = vpack.c.b16 %v2091, %v2087
    %v2264 = vpack.c.b16 %v2092, %v2088
    %v2265 = vpack.c.b16 %v2093, %v2089
    %v2266 = vpack.c.b16 %v2094, %v2090
    %v2267 = vpack.c.b16 %v2099, %v2095
    %v2268 = vpack.c.b16 %v2100, %v2096
    %v2269 = vpack.c.b16 %v2101, %v2097
    %v2270 = vpack.c.b16 %v2102, %v2098
    %v2271 = vpack.c.b16 %v2107, %v2103
    %v2272 = vpack.c.b16 %v2108, %v2104
    %v2273 = vpack.c.b16 %v2109, %v2105
    %v2274 = vpack.c.b16 %v2110, %v2106
    %v2275 = vpack.c.b16 %v2115, %v2111
    %v2276 = vpack.c.b16 %v2116, %v2112
    %v2277 = vpack.c.b16 %v2117, %v2113
    %v2278 = vpack.c.b16 %v2118, %v2114
    %v2279 = vpack.c.b16 %v2123, %v2119
    %v2280 = vpack.c.b16 %v2124, %v2120
    %v2281 = vpack.c.b16 %v2125, %v2121
    %v2282 = vpack.c.b16 %v2126, %v2122
    %v2283 = vpack.c.b16 %v2131, %v2127
    %v2284 = vpack.c.b16 %v2132, %v2128
    %v2285 = vpack.c.b16 %v2133, %v2129
    %v2286 = vpack.c.b16 %v2134, %v2130
    %v2287 = vpack.c.b16 %v2139, %v2135
    %v2288 = vpack.c.b16 %v2140, %v2136
    %v2289 = vpack.c.b16 %v2141, %v2137
    %v2290 = vpack.c.b16 %v2142, %v2138
    %v2291 = vpack.c.b16 %v2147, %v2143
    %v2292 = vpack.c.b16 %v2148, %v2144
    %v2293 = vpack.c.b16 %v2149, %v2145
    %v2294 = vpack.c.b16 %v2150, %v2146
    %v2295 = vpack.c.b16 %v2155, %v2151
    %v2296 = vpack.c.b16 %v2156, %v2152
    %v2297 = vpack.c.b16 %v2157, %v2153
    %v2298 = vpack.c.b16 %v2158, %v2154
    %v2299 = vpack.c.b16 %v2163, %v2159
    %v2300 = vpack.c.b16 %v2164, %v2160
    %v2301 = vpack.c.b16 %v2165, %v2161
    %v2302 = vpack.c.b16 %v2166, %v2162
    %v2303 = vpack.c.b16 %v2171, %v2167
    %v2304 = vpack.c.b16 %v2172, %v2168
    %v2305 = vpack.c.b16 %v2173, %v2169
    %v2306 = vpack.c.b16 %v2174, %v2170
    %v2307 = vpack.c.b16 %v2179, %v2175
    %v2308 = vpack.c.b16 %v2180, %v2176
    %v2309 = vpack.c.b16 %v2181, %v2177
    %v2310 = vpack.c.b16 %v2182, %v2178
    %v2311 = vpack.c.b16 %v2187, %v2183
    %v2312 = vpack.c.b16 %v2188, %v2184
    %v2313 = vpack.c.b16 %v2189, %v2185
    %v2314 = vpack.c.b16 %v2190, %v2186
    %v2315 = vpack.c.b16 %v2195, %v2191
    %v2316 = vpack.c.b16 %v2196, %v2192
    %v2317 = vpack.c.b16 %v2197, %v2193
    %v2318 = vpack.c.b16 %v2198, %v2194
    %v2319 = vpack.c.b16 %v2203, %v2199
    %v2320 = vpack.c.b16 %v2204, %v2200
    %v2321 = vpack.c.b16 %v2205, %v2201
    %v2322 = vpack.c.b16 %v2206, %v2202
    %v2323 = vpack.c.b16 %v2211, %v2207
    %v2324 = vpack.c.b16 %v2212, %v2208
    %v2325 = vpack.c.b16 %v2213, %v2209
    %v2326 = vpack.c.b16 %v2214, %v2210
    %v2327 = vpack.c.b16 %v2219, %v2215
    %v2328 = vpack.c.b16 %v2220, %v2216
    %v2329 = vpack.c.b16 %v2221, %v2217
    %v2330 = vpack.c.b16 %v2222, %v2218
    %v2331 = vpack.c.b16 %v2227, %v2223
    %v2332 = vpack.c.b16 %v2228, %v2224
    %v2333 = vpack.c.b16 %v2229, %v2225
    %v2334 = vpack.c.b16 %v2230, %v2226
    %v2335 = vpack.c.b16 %v2235, %v2231
    %v2336 = vpack.c.b16 %v2236, %v2232
    %v2337 = vpack.c.b16 %v2237, %v2233
    %v2338 = vpack.c.b16 %v2238, %v2234
    %2439 = vmatpush.bf16.msra.mxu0 %v2267
    %2440 = vmatpush.bf16.msra.mxu0 %v2263
    %2441 = vmatpush.bf16.msra.mxu0 %v2259
    %2442 = vmatpush.bf16.msra.mxu0 %v2255
    %2443 = vmatpush.bf16.msra.mxu0 %v2251
    %2444 = vmatpush.bf16.msra.mxu0 %v2247
    %2445 = vmatpush.bf16.msra.mxu0 %v2243
    %2446 = vmatpush.bf16.msra.mxu0 %v2239
    %2447 = vmatmul.bf16.gmra.mxu0 %v1435
    %v2448 = vpop.f32.mrf.mxu0
    %v2449 = vadd.f32 0.0, %v2448
    %v2450 = vpop.f32.mrf.mxu0
    %v2451 = vadd.f32 0.0, %v2450
    %2452 = vmatmul.bf16.gmra.mxu0 %v1439
    %v2453 = vpop.f32.mrf.mxu0
    %v2454 = vadd.f32 0.0, %v2453
    %v2455 = vpop.f32.mrf.mxu0
    %v2456 = vadd.f32 0.0, %v2455
    %2457 = vmatmul.bf16.gmra.mxu0 %v1443
    %v2458 = vpop.f32.mrf.mxu0
    %v2459 = vadd.f32 0.0, %v2458
    %v2460 = vpop.f32.mrf.mxu0
    %v2461 = vadd.f32 0.0, %v2460
    %2462 = vmatmul.bf16.gmra.mxu0 %v1447
    %v2463 = vpop.f32.mrf.mxu0
    %v2464 = vadd.f32 0.0, %v2463
    %v2465 = vpop.f32.mrf.mxu0
    %v2466 = vadd.f32 0.0, %v2465
    %2467 = vdwg.mxu0
    %2468 = vmatpush.bf16.msra.mxu0 %v2299
    %2469 = vmatpush.bf16.msra.mxu0 %v2295
    %2470 = vmatpush.bf16.msra.mxu0 %v2291
    %2471 = vmatpush.bf16.msra.mxu0 %v2287
    %2472 = vmatpush.bf16.msra.mxu0 %v2283
    %2473 = vmatpush.bf16.msra.mxu0 %v2279
    %2474 = vmatpush.bf16.msra.mxu0 %v2275
    %2475 = vmatpush.bf16.msra.mxu0 %v2271
    %2476 = vmatmul.bf16.gmra.mxu0 %v1436
    %v2477 = vpop.f32.mrf.mxu0
    %v2478 = vadd.f32 %v2449, %v2477
    %v2479 = vpop.f32.mrf.mxu0
    %v2480 = vadd.f32 %v2451, %v2479
    %2481 = vmatmul.bf16.gmra.mxu0 %v1440
    %v2482 = vpop.f32.mrf.mxu0
    %v2483 = vadd.f32 %v2454, %v2482
    %v2484 = vpop.f32.mrf.mxu0
    %v2485 = vadd.f32 %v2456, %v2484
    %2486 = vmatmul.bf16.gmra.mxu0 %v1444
    %v2487 = vpop.f32.mrf.mxu0
    %v2488 = vadd.f32 %v2459, %v2487
    %v2489 = vpop.f32.mrf.mxu0
    %v2490 = vadd.f32 %v2461, %v2489
    %2491 = vmatmul.bf16.gmra.mxu0 %v1448
    %v2492 = vpop.f32.mrf.mxu0
    %v2493 = vadd.f32 %v2464, %v2492
    %v2494 = vpop.f32.mrf.mxu0
    %v2495 = vadd.f32 %v2466, %v2494
    %2496 = vdwg.mxu0
    %2497 = vmatpush.bf16.msra.mxu0 %v2331
    %2498 = vmatpush.bf16.msra.mxu0 %v2327
    %2499 = vmatpush.bf16.msra.mxu0 %v2323
    %2500 = vmatpush.bf16.msra.mxu0 %v2319
    %2501 = vmatpush.bf16.msra.mxu0 %v2315
    %2502 = vmatpush.bf16.msra.mxu0 %v2311
    %2503 = vmatpush.bf16.msra.mxu0 %v2307
    %2504 = vmatpush.bf16.msra.mxu0 %v2303
    %2505 = vmatmul.bf16.gmra.mxu0 %v1437
    %v2506 = vpop.f32.mrf.mxu0
    %v2507 = vadd.f32 %v2478, %v2506
    %v2508 = vpop.f32.mrf.mxu0
    %v2509 = vadd.f32 %v2480, %v2508
    %2510 = vmatmul.bf16.gmra.mxu0 %v1441
    %v2511 = vpop.f32.mrf.mxu0
    %v2512 = vadd.f32 %v2483, %v2511
    %v2513 = vpop.f32.mrf.mxu0
    %v2514 = vadd.f32 %v2485, %v2513
    %2515 = vmatmul.bf16.gmra.mxu0 %v1445
    %v2516 = vpop.f32.mrf.mxu0
    %v2517 = vadd.f32 %v2488, %v2516
    %v2518 = vpop.f32.mrf.mxu0
    %v2519 = vadd.f32 %v2490, %v2518
    %2520 = vmatmul.bf16.gmra.mxu0 %v1449
    %v2521 = vpop.f32.mrf.mxu0
    %v2522 = vadd.f32 %v2493, %v2521
    %v2523 = vpop.f32.mrf.mxu0
    %v2524 = vadd.f32 %v2495, %v2523
    %2525 = vdwg.mxu0
    %2526 = vmatpush.bf16.msra.mxu0 0
    %2527 = vmatpush.bf16.msra.mxu0 0
    %2528 = vmatpush.bf16.msra.mxu0 0
    %2529 = vmatpush.bf16.msra.mxu0 0
    %2530 = vmatpush.bf16.msra.mxu0 0
    %2531 = vmatpush.bf16.msra.mxu0 0
    %2532 = vmatpush.bf16.msra.mxu0 0
    %2533 = vmatpush.bf16.msra.mxu0 %v2335
    %2534 = vmatmul.bf16.gmra.mxu0 %v1464
    %v2535 = vpop.f32.mrf.mxu0
    %v2536 = vadd.f32 %v2507, %v2535
    %v2537 = vpop.f32.mrf.mxu0
    %v2538 = vadd.f32 %v2509, %v2537
    %2539 = vmatmul.bf16.gmra.mxu0 %v1467
    %v2540 = vpop.f32.mrf.mxu0
    %v2541 = vadd.f32 %v2512, %v2540
    %v2542 = vpop.f32.mrf.mxu0
    %v2543 = vadd.f32 %v2514, %v2542
    %2544 = vmatmul.bf16.gmra.mxu0 %v1470
    %v2545 = vpop.f32.mrf.mxu0
    %v2546 = vadd.f32 %v2517, %v2545
    %v2547 = vpop.f32.mrf.mxu0
    %v2548 = vadd.f32 %v2519, %v2547
    %2549 = vmatmul.bf16.gmra.mxu0 %v1473
    %v2550 = vpop.f32.mrf.mxu0
    %v2551 = vadd.f32 %v2522, %v2550
    %v2552 = vpop.f32.mrf.mxu0
    %v2553 = vadd.f32 %v2524, %v2552
    %2554 = vdwg.mxu0
    %2555 = vmatpush.bf16.msra.mxu0 %v2268
    %2556 = vmatpush.bf16.msra.mxu0 %v2264
    %2557 = vmatpush.bf16.msra.mxu0 %v2260
    %2558 = vmatpush.bf16.msra.mxu0 %v2256
    %2559 = vmatpush.bf16.msra.mxu0 %v2252
    %2560 = vmatpush.bf16.msra.mxu0 %v2248
    %2561 = vmatpush.bf16.msra.mxu0 %v2244
    %2562 = vmatpush.bf16.msra.mxu0 %v2240
    %2563 = vmatmul.bf16.gmra.mxu0 %v1435
    %v2564 = vpop.f32.mrf.mxu0
    %v2565 = vadd.f32 0.0, %v2564
    %v2566 = vpop.f32.mrf.mxu0
    %v2567 = vadd.f32 0.0, %v2566
    %2568 = vmatmul.bf16.gmra.mxu0 %v1439
    %v2569 = vpop.f32.mrf.mxu0
    %v2570 = vadd.f32 0.0, %v2569
    %v2571 = vpop.f32.mrf.mxu0
    %v2572 = vadd.f32 0.0, %v2571
    %2573 = vmatmul.bf16.gmra.mxu0 %v1443
    %v2574 = vpop.f32.mrf.mxu0
    %v2575 = vadd.f32 0.0, %v2574
    %v2576 = vpop.f32.mrf.mxu0
    %v2577 = vadd.f32 0.0, %v2576
    %2578 = vmatmul.bf16.gmra.mxu0 %v1447
    %v2579 = vpop.f32.mrf.mxu0
    %v2580 = vadd.f32 0.0, %v2579
    %v2581 = vpop.f32.mrf.mxu0
    %v2582 = vadd.f32 0.0, %v2581
    %2583 = vdwg.mxu0
    %2584 = vmatpush.bf16.msra.mxu0 %v2300
    %2585 = vmatpush.bf16.msra.mxu0 %v2296
    %2586 = vmatpush.bf16.msra.mxu0 %v2292
    %2587 = vmatpush.bf16.msra.mxu0 %v2288
    %2588 = vmatpush.bf16.msra.mxu0 %v2284
    %2589 = vmatpush.bf16.msra.mxu0 %v2280
    %2590 = vmatpush.bf16.msra.mxu0 %v2276
    %2591 = vmatpush.bf16.msra.mxu0 %v2272
    %2592 = vmatmul.bf16.gmra.mxu0 %v1436
    %v2593 = vpop.f32.mrf.mxu0
    %v2594 = vadd.f32 %v2565, %v2593
    %v2595 = vpop.f32.mrf.mxu0
    %v2596 = vadd.f32 %v2567, %v2595
    %2597 = vmatmul.bf16.gmra.mxu0 %v1440
    %v2598 = vpop.f32.mrf.mxu0
    %v2599 = vadd.f32 %v2570, %v2598
    %v2600 = vpop.f32.mrf.mxu0
    %v2601 = vadd.f32 %v2572, %v2600
    %2602 = vmatmul.bf16.gmra.mxu0 %v1444
    %v2603 = vpop.f32.mrf.mxu0
    %v2604 = vadd.f32 %v2575, %v2603
    %v2605 = vpop.f32.mrf.mxu0
    %v2606 = vadd.f32 %v2577, %v2605
    %2607 = vmatmul.bf16.gmra.mxu0 %v1448
    %v2608 = vpop.f32.mrf.mxu0
    %v2609 = vadd.f32 %v2580, %v2608
    %v2610 = vpop.f32.mrf.mxu0
    %v2611 = vadd.f32 %v2582, %v2610
    %2612 = vdwg.mxu0
    %2613 = vmatpush.bf16.msra.mxu0 %v2332
    %2614 = vmatpush.bf16.msra.mxu0 %v2328
    %2615 = vmatpush.bf16.msra.mxu0 %v2324
    %2616 = vmatpush.bf16.msra.mxu0 %v2320
    %2617 = vmatpush.bf16.msra.mxu0 %v2316
    %2618 = vmatpush.bf16.msra.mxu0 %v2312
    %2619 = vmatpush.bf16.msra.mxu0 %v2308
    %2620 = vmatpush.bf16.msra.mxu0 %v2304
    %2621 = vmatmul.bf16.gmra.mxu0 %v1437
    %v2622 = vpop.f32.mrf.mxu0
    %v2623 = vadd.f32 %v2594, %v2622
    %v2624 = vpop.f32.mrf.mxu0
    %v2625 = vadd.f32 %v2596, %v2624
    %2626 = vmatmul.bf16.gmra.mxu0 %v1441
    %v2627 = vpop.f32.mrf.mxu0
    %v2628 = vadd.f32 %v2599, %v2627
    %v2629 = vpop.f32.mrf.mxu0
    %v2630 = vadd.f32 %v2601, %v2629
    %2631 = vmatmul.bf16.gmra.mxu0 %v1445
    %v2632 = vpop.f32.mrf.mxu0
    %v2633 = vadd.f32 %v2604, %v2632
    %v2634 = vpop.f32.mrf.mxu0
    %v2635 = vadd.f32 %v2606, %v2634
    %2636 = vmatmul.bf16.gmra.mxu0 %v1449
    %v2637 = vpop.f32.mrf.mxu0
    %v2638 = vadd.f32 %v2609, %v2637
    %v2639 = vpop.f32.mrf.mxu0
    %v2640 = vadd.f32 %v2611, %v2639
    %2641 = vdwg.mxu0
    %2642 = vmatpush.bf16.msra.mxu0 0
    %2643 = vmatpush.bf16.msra.mxu0 0
    %2644 = vmatpush.bf16.msra.mxu0 0
    %2645 = vmatpush.bf16.msra.mxu0 0
    %2646 = vmatpush.bf16.msra.mxu0 0
    %2647 = vmatpush.bf16.msra.mxu0 0
    %2648 = vmatpush.bf16.msra.mxu0 0
    %2649 = vmatpush.bf16.msra.mxu0 %v2336
    %2650 = vmatmul.bf16.gmra.mxu0 %v1464
    %v2651 = vpop.f32.mrf.mxu0
    %v2652 = vadd.f32 %v2623, %v2651
    %v2653 = vpop.f32.mrf.mxu0
    %v2654 = vadd.f32 %v2625, %v2653
    %2655 = vmatmul.bf16.gmra.mxu0 %v1467
    %v2656 = vpop.f32.mrf.mxu0
    %v2657 = vadd.f32 %v2628, %v2656
    %v2658 = vpop.f32.mrf.mxu0
    %v2659 = vadd.f32 %v2630, %v2658
    %2660 = vmatmul.bf16.gmra.mxu0 %v1470
    %v2661 = vpop.f32.mrf.mxu0
    %v2662 = vadd.f32 %v2633, %v2661
    %v2663 = vpop.f32.mrf.mxu0
    %v2664 = vadd.f32 %v2635, %v2663
    %2665 = vmatmul.bf16.gmra.mxu0 %v1473
    %v2666 = vpop.f32.mrf.mxu0
    %v2667 = vadd.f32 %v2638, %v2666
    %v2668 = vpop.f32.mrf.mxu0
    %v2669 = vadd.f32 %v2640, %v2668
    %2670 = vdwg.mxu0
    %2671 = vmatpush.bf16.msra.mxu0 %v2269
    %2672 = vmatpush.bf16.msra.mxu0 %v2265
    %2673 = vmatpush.bf16.msra.mxu0 %v2261
    %2674 = vmatpush.bf16.msra.mxu0 %v2257
    %2675 = vmatpush.bf16.msra.mxu0 %v2253
    %2676 = vmatpush.bf16.msra.mxu0 %v2249
    %2677 = vmatpush.bf16.msra.mxu0 %v2245
    %2678 = vmatpush.bf16.msra.mxu0 %v2241
    %2679 = vmatmul.bf16.gmra.mxu0 %v1435
    %v2680 = vpop.f32.mrf.mxu0
    %v2681 = vadd.f32 0.0, %v2680
    %v2682 = vpop.f32.mrf.mxu0
    %v2683 = vadd.f32 0.0, %v2682
    %2684 = vmatmul.bf16.gmra.mxu0 %v1439
    %v2685 = vpop.f32.mrf.mxu0
    %v2686 = vadd.f32 0.0, %v2685
    %v2687 = vpop.f32.mrf.mxu0
    %v2688 = vadd.f32 0.0, %v2687
    %2689 = vmatmul.bf16.gmra.mxu0 %v1443
    %v2690 = vpop.f32.mrf.mxu0
    %v2691 = vadd.f32 0.0, %v2690
    %v2692 = vpop.f32.mrf.mxu0
    %v2693 = vadd.f32 0.0, %v2692
    %2694 = vmatmul.bf16.gmra.mxu0 %v1447
    %v2695 = vpop.f32.mrf.mxu0
    %v2696 = vadd.f32 0.0, %v2695
    %v2697 = vpop.f32.mrf.mxu0
    %v2698 = vadd.f32 0.0, %v2697
    %2699 = vdwg.mxu0
    %2700 = vmatpush.bf16.msra.mxu0 %v2301
    %2701 = vmatpush.bf16.msra.mxu0 %v2297
    %2702 = vmatpush.bf16.msra.mxu0 %v2293
    %2703 = vmatpush.bf16.msra.mxu0 %v2289
    %2704 = vmatpush.bf16.msra.mxu0 %v2285
    %2705 = vmatpush.bf16.msra.mxu0 %v2281
    %2706 = vmatpush.bf16.msra.mxu0 %v2277
    %2707 = vmatpush.bf16.msra.mxu0 %v2273
    %2708 = vmatmul.bf16.gmra.mxu0 %v1436
    %v2709 = vpop.f32.mrf.mxu0
    %v2710 = vadd.f32 %v2681, %v2709
    %v2711 = vpop.f32.mrf.mxu0
    %v2712 = vadd.f32 %v2683, %v2711
    %2713 = vmatmul.bf16.gmra.mxu0 %v1440
    %v2714 = vpop.f32.mrf.mxu0
    %v2715 = vadd.f32 %v2686, %v2714
    %v2716 = vpop.f32.mrf.mxu0
    %v2717 = vadd.f32 %v2688, %v2716
    %2718 = vmatmul.bf16.gmra.mxu0 %v1444
    %v2719 = vpop.f32.mrf.mxu0
    %v2720 = vadd.f32 %v2691, %v2719
    %v2721 = vpop.f32.mrf.mxu0
    %v2722 = vadd.f32 %v2693, %v2721
    %2723 = vmatmul.bf16.gmra.mxu0 %v1448
    %v2724 = vpop.f32.mrf.mxu0
    %v2725 = vadd.f32 %v2696, %v2724
    %v2726 = vpop.f32.mrf.mxu0
    %v2727 = vadd.f32 %v2698, %v2726
    %2728 = vdwg.mxu0
    %2729 = vmatpush.bf16.msra.mxu0 %v2333
    %2730 = vmatpush.bf16.msra.mxu0 %v2329
    %2731 = vmatpush.bf16.msra.mxu0 %v2325
    %2732 = vmatpush.bf16.msra.mxu0 %v2321
    %2733 = vmatpush.bf16.msra.mxu0 %v2317
    %2734 = vmatpush.bf16.msra.mxu0 %v2313
    %2735 = vmatpush.bf16.msra.mxu0 %v2309
    %2736 = vmatpush.bf16.msra.mxu0 %v2305
    %2737 = vmatmul.bf16.gmra.mxu0 %v1437
    %v2738 = vpop.f32.mrf.mxu0
    %v2739 = vadd.f32 %v2710, %v2738
    %v2740 = vpop.f32.mrf.mxu0
    %v2741 = vadd.f32 %v2712, %v2740
    %2742 = vmatmul.bf16.gmra.mxu0 %v1441
    %v2743 = vpop.f32.mrf.mxu0
    %v2744 = vadd.f32 %v2715, %v2743
    %v2745 = vpop.f32.mrf.mxu0
    %v2746 = vadd.f32 %v2717, %v2745
    %2747 = vmatmul.bf16.gmra.mxu0 %v1445
    %v2748 = vpop.f32.mrf.mxu0
    %v2749 = vadd.f32 %v2720, %v2748
    %v2750 = vpop.f32.mrf.mxu0
    %v2751 = vadd.f32 %v2722, %v2750
    %2752 = vmatmul.bf16.gmra.mxu0 %v1449
    %v2753 = vpop.f32.mrf.mxu0
    %v2754 = vadd.f32 %v2725, %v2753
    %v2755 = vpop.f32.mrf.mxu0
    %v2756 = vadd.f32 %v2727, %v2755
    %2757 = vdwg.mxu0
    %2758 = vmatpush.bf16.msra.mxu0 0
    %2759 = vmatpush.bf16.msra.mxu0 0
    %2760 = vmatpush.bf16.msra.mxu0 0
    %2761 = vmatpush.bf16.msra.mxu0 0
    %2762 = vmatpush.bf16.msra.mxu0 0
    %2763 = vmatpush.bf16.msra.mxu0 0
    %2764 = vmatpush.bf16.msra.mxu0 0
    %2765 = vmatpush.bf16.msra.mxu0 %v2337
    %2766 = vmatmul.bf16.gmra.mxu0 %v1464
    %v2767 = vpop.f32.mrf.mxu0
    %v2768 = vadd.f32 %v2739, %v2767
    %v2769 = vpop.f32.mrf.mxu0
    %v2770 = vadd.f32 %v2741, %v2769
    %2771 = vmatmul.bf16.gmra.mxu0 %v1467
    %v2772 = vpop.f32.mrf.mxu0
    %v2773 = vadd.f32 %v2744, %v2772
    %v2774 = vpop.f32.mrf.mxu0
    %v2775 = vadd.f32 %v2746, %v2774
    %2776 = vmatmul.bf16.gmra.mxu0 %v1470
    %v2777 = vpop.f32.mrf.mxu0
    %v2778 = vadd.f32 %v2749, %v2777
    %v2779 = vpop.f32.mrf.mxu0
    %v2780 = vadd.f32 %v2751, %v2779
    %2781 = vmatmul.bf16.gmra.mxu0 %v1473
    %v2782 = vpop.f32.mrf.mxu0
    %v2783 = vadd.f32 %v2754, %v2782
    %v2784 = vpop.f32.mrf.mxu0
    %v2785 = vadd.f32 %v2756, %v2784
    %2786 = vdwg.mxu0
    %2787 = vmatpush.bf16.msra.mxu0 %v2270
    %2788 = vmatpush.bf16.msra.mxu0 %v2266
    %2789 = vmatpush.bf16.msra.mxu0 %v2262
    %2790 = vmatpush.bf16.msra.mxu0 %v2258
    %2791 = vmatpush.bf16.msra.mxu0 %v2254
    %2792 = vmatpush.bf16.msra.mxu0 %v2250
    %2793 = vmatpush.bf16.msra.mxu0 %v2246
    %2794 = vmatpush.bf16.msra.mxu0 %v2242
    %2795 = vmatmul.bf16.gmra.mxu0 %v1435
    %v2796 = vpop.f32.mrf.mxu0
    %v2797 = vadd.f32 0.0, %v2796
    %v2798 = vpop.f32.mrf.mxu0
    %v2799 = vadd.f32 0.0, %v2798
    %2800 = vmatmul.bf16.gmra.mxu0 %v1439
    %v2801 = vpop.f32.mrf.mxu0
    %v2802 = vadd.f32 0.0, %v2801
    %v2803 = vpop.f32.mrf.mxu0
    %v2804 = vadd.f32 0.0, %v2803
    %2805 = vmatmul.bf16.gmra.mxu0 %v1443
    %v2806 = vpop.f32.mrf.mxu0
    %v2807 = vadd.f32 0.0, %v2806
    %v2808 = vpop.f32.mrf.mxu0
    %v2809 = vadd.f32 0.0, %v2808
    %2810 = vmatmul.bf16.gmra.mxu0 %v1447
    %v2811 = vpop.f32.mrf.mxu0
    %v2812 = vadd.f32 0.0, %v2811
    %v2813 = vpop.f32.mrf.mxu0
    %v2814 = vadd.f32 0.0, %v2813
    %2815 = vdwg.mxu0
    %2816 = vmatpush.bf16.msra.mxu0 %v2302
    %2817 = vmatpush.bf16.msra.mxu0 %v2298
    %2818 = vmatpush.bf16.msra.mxu0 %v2294
    %2819 = vmatpush.bf16.msra.mxu0 %v2290
    %2820 = vmatpush.bf16.msra.mxu0 %v2286
    %2821 = vmatpush.bf16.msra.mxu0 %v2282
    %2822 = vmatpush.bf16.msra.mxu0 %v2278
    %2823 = vmatpush.bf16.msra.mxu0 %v2274
    %2824 = vmatmul.bf16.gmra.mxu0 %v1436
    %v2825 = vpop.f32.mrf.mxu0
    %v2826 = vadd.f32 %v2797, %v2825
    %v2827 = vpop.f32.mrf.mxu0
    %v2828 = vadd.f32 %v2799, %v2827
    %2829 = vmatmul.bf16.gmra.mxu0 %v1440
    %v2830 = vpop.f32.mrf.mxu0
    %v2831 = vadd.f32 %v2802, %v2830
    %v2832 = vpop.f32.mrf.mxu0
    %v2833 = vadd.f32 %v2804, %v2832
    %2834 = vmatmul.bf16.gmra.mxu0 %v1444
    %v2835 = vpop.f32.mrf.mxu0
    %v2836 = vadd.f32 %v2807, %v2835
    %v2837 = vpop.f32.mrf.mxu0
    %v2838 = vadd.f32 %v2809, %v2837
    %2839 = vmatmul.bf16.gmra.mxu0 %v1448
    %v2840 = vpop.f32.mrf.mxu0
    %v2841 = vadd.f32 %v2812, %v2840
    %v2842 = vpop.f32.mrf.mxu0
    %v2843 = vadd.f32 %v2814, %v2842
    %2844 = vdwg.mxu0
    %2845 = vmatpush.bf16.msra.mxu0 %v2334
    %2846 = vmatpush.bf16.msra.mxu0 %v2330
    %2847 = vmatpush.bf16.msra.mxu0 %v2326
    %2848 = vmatpush.bf16.msra.mxu0 %v2322
    %2849 = vmatpush.bf16.msra.mxu0 %v2318
    %2850 = vmatpush.bf16.msra.mxu0 %v2314
    %2851 = vmatpush.bf16.msra.mxu0 %v2310
    %2852 = vmatpush.bf16.msra.mxu0 %v2306
    %2853 = vmatmul.bf16.gmra.mxu0 %v1437
    %v2854 = vpop.f32.mrf.mxu0
    %v2855 = vadd.f32 %v2826, %v2854
    %v2856 = vpop.f32.mrf.mxu0
    %v2857 = vadd.f32 %v2828, %v2856
    %2858 = vmatmul.bf16.gmra.mxu0 %v1441
    %v2859 = vpop.f32.mrf.mxu0
    %v2860 = vadd.f32 %v2831, %v2859
    %v2861 = vpop.f32.mrf.mxu0
    %v2862 = vadd.f32 %v2833, %v2861
    %2863 = vmatmul.bf16.gmra.mxu0 %v1445
    %v2864 = vpop.f32.mrf.mxu0
    %v2865 = vadd.f32 %v2836, %v2864
    %v2866 = vpop.f32.mrf.mxu0
    %v2867 = vadd.f32 %v2838, %v2866
    %2868 = vmatmul.bf16.gmra.mxu0 %v1449
    %v2869 = vpop.f32.mrf.mxu0
    %v2870 = vadd.f32 %v2841, %v2869
    %v2871 = vpop.f32.mrf.mxu0
    %v2872 = vadd.f32 %v2843, %v2871
    %2873 = vdwg.mxu0
    %2874 = vmatpush.bf16.msra.mxu0 0
    %2875 = vmatpush.bf16.msra.mxu0 0
    %2876 = vmatpush.bf16.msra.mxu0 0
    %2877 = vmatpush.bf16.msra.mxu0 0
    %2878 = vmatpush.bf16.msra.mxu0 0
    %2879 = vmatpush.bf16.msra.mxu0 0
    %2880 = vmatpush.bf16.msra.mxu0 0
    %2881 = vmatpush.bf16.msra.mxu0 %v2338
    %2882 = vmatmul.bf16.gmra.mxu0 %v1464
    %v2883 = vpop.f32.mrf.mxu0
    %v2884 = vadd.f32 %v2855, %v2883
    %v2885 = vpop.f32.mrf.mxu0
    %v2886 = vadd.f32 %v2857, %v2885
    %2887 = vmatmul.bf16.gmra.mxu0 %v1467
    %v2888 = vpop.f32.mrf.mxu0
    %v2889 = vadd.f32 %v2860, %v2888
    %v2890 = vpop.f32.mrf.mxu0
    %v2891 = vadd.f32 %v2862, %v2890
    %2892 = vmatmul.bf16.gmra.mxu0 %v1470
    %v2893 = vpop.f32.mrf.mxu0
    %v2894 = vadd.f32 %v2865, %v2893
    %v2895 = vpop.f32.mrf.mxu0
    %v2896 = vadd.f32 %v2867, %v2895
    %2897 = vmatmul.bf16.gmra.mxu0 %v1473
    %v2898 = vpop.f32.mrf.mxu0
    %v2899 = vadd.f32 %v2870, %v2898
    %v2900 = vpop.f32.mrf.mxu0
    %v2901 = vadd.f32 %v2872, %v2900
    %2902 = vdwg.mxu0
    %v2903 = vadd.f32 %v1572, %v2536
    %v2904 = vadd.f32 %v1688, %v2652
    %v2905 = vadd.f32 %v1804, %v2768
    %v2906 = vadd.f32 %v1920, %v2884
    %v2907 = vadd.f32 %v1574, %v2538
    %v2908 = vadd.f32 %v1690, %v2654
    %v2909 = vadd.f32 %v1806, %v2770
    %v2910 = vadd.f32 %v1922, %v2886
    %v2911 = vadd.f32 %v1577, %v2541
    %v2912 = vadd.f32 %v1693, %v2657
    %v2913 = vadd.f32 %v1809, %v2773
    %v2914 = vadd.f32 %v1925, %v2889
    %v2915 = vadd.f32 %v1579, %v2543
    %v2916 = vadd.f32 %v1695, %v2659
    %v2917 = vadd.f32 %v1811, %v2775
    %v2918 = vadd.f32 %v1927, %v2891
    %v2919 = vadd.f32 %v1582, %v2546
    %v2920 = vadd.f32 %v1698, %v2662
    %v2921 = vadd.f32 %v1814, %v2778
    %v2922 = vadd.f32 %v1930, %v2894
    %v2923 = vadd.f32 %v1584, %v2548
    %v2924 = vadd.f32 %v1700, %v2664
    %v2925 = vadd.f32 %v1816, %v2780
    %v2926 = vadd.f32 %v1932, %v2896
    %v2927 = vadd.f32 %v1587, %v2551
    %v2928 = vadd.f32 %v1703, %v2667
    %v2929 = vadd.f32 %v1819, %v2783
    %v2930 = vadd.f32 %v1935, %v2899
    %v2931 = vadd.f32 %v1589, %v2553
    %v2932 = vadd.f32 %v1705, %v2669
    %v2933 = vadd.f32 %v1821, %v2785
    %v2934 = vadd.f32 %v1937, %v2901
    %v2935 = vmul.f32 %v2903, %v2903
    %v2936 = vmul.f32 %v2904, %v2904
    %v2937 = vmul.f32 %v2907, %v2907
    %v2938 = vmul.f32 %v2908, %v2908
    %v2939 = vmul.f32 %v2911, %v2911
    %v2940 = vmul.f32 %v2912, %v2912
    %v2941 = vmul.f32 %v2915, %v2915
    %v2942 = vmul.f32 %v2916, %v2916
    %v2943 = vmul.f32 %v2919, %v2919
    %v2944 = vmul.f32 %v2920, %v2920
    %v2945 = vmul.f32 %v2923, %v2923
    %v2946 = vmul.f32 %v2924, %v2924
    %v2947 = vmul.f32 %v2927, %v2927
    %v2948 = vmul.f32 %v2928, %v2928
    %v2949 = vmul.f32 %v2931, %v2931
    %v2950 = vmul.f32 %v2932, %v2932
    %v2951 = vmul.f32 %v2905, %v2905
    %v2952 = vmul.f32 %v2906, %v2906
    %v2953 = vmul.f32 %v2909, %v2909
    %v2954 = vmul.f32 %v2910, %v2910
    %v2955 = vmul.f32 %v2913, %v2913
    %v2956 = vmul.f32 %v2914, %v2914
    %v2957 = vmul.f32 %v2917, %v2917
    %v2958 = vmul.f32 %v2918, %v2918
    %v2959 = vmul.f32 %v2921, %v2921
    %v2960 = vmul.f32 %v2922, %v2922
    %v2961 = vmul.f32 %v2925, %v2925
    %v2962 = vmul.f32 %v2926, %v2926
    %v2963 = vmul.f32 %v2929, %v2929
    %v2964 = vmul.f32 %v2930, %v2930
    %v2965 = vmul.f32 %v2933, %v2933
    %v2966 = vmul.f32 %v2934, %v2934
    %v2967 = vadd.f32 %v2935, %v2951
    %v2968 = vadd.f32 %v2936, %v2952
    %v2969 = vadd.f32 %v2937, %v2953
    %v2970 = vadd.f32 %v2938, %v2954
    %v2971 = vadd.f32 %v2939, %v2955
    %v2972 = vadd.f32 %v2940, %v2956
    %v2973 = vadd.f32 %v2941, %v2957
    %v2974 = vadd.f32 %v2942, %v2958
    %v2975 = vadd.f32 %v2943, %v2959
    %v2976 = vadd.f32 %v2944, %v2960
    %v2977 = vadd.f32 %v2945, %v2961
    %v2978 = vadd.f32 %v2946, %v2962
    %v2979 = vadd.f32 %v2947, %v2963
    %v2980 = vadd.f32 %v2948, %v2964
    %v2981 = vadd.f32 %v2949, %v2965
    %v2982 = vadd.f32 %v2950, %v2966
    %v2983 = vpack.c.bf16 %v2969, %v2967
    %v2984 = vpack.c.bf16 %v2970, %v2968
    %v2985 = vpack.c.bf16 %v2973, %v2971
    %v2986 = vpack.c.bf16 %v2974, %v2972
    %v2987 = vpack.c.bf16 %v2977, %v2975
    %v2988 = vpack.c.bf16 %v2978, %v2976
    %v2989 = vpack.c.bf16 %v2981, %v2979
    %v2990 = vpack.c.bf16 %v2982, %v2980
    %v2991 = vld [vmem:[#allocation8] sm:$0xf]
    %v2992 = vld [vmem:[#allocation8 + $0x4] sm:$0xf]
    %v2993 = vld [vmem:[#allocation8 + $0x8] sm:$0xf]
    %v2994 = vld [vmem:[#allocation8 + $0xc] sm:$0xf]
    %v2995 = vld [vmem:[#allocation8 + $0x10] sm:$0xf]
    %v2996 = vld [vmem:[#allocation8 + $0x14] sm:$0xf]
    %v2997 = vld [vmem:[#allocation8 + $0x18] sm:$0xf]
    %v2998 = vld [vmem:[#allocation8 + $0x1c] sm:$0xf]
    %v2999 = vld [vmem:[#allocation8 + $0x20] sm:$0xf]
    %v3000 = vld [vmem:[#allocation8 + $0x24] sm:$0xf]
    %v3001 = vld [vmem:[#allocation8 + $0x28] sm:$0xf]
    %v3002 = vld [vmem:[#allocation8 + $0x2c] sm:$0xf]
    %v3003 = vld [vmem:[#allocation8 + $0x30] sm:$0xf]
    %v3004 = vld [vmem:[#allocation8 + $0x34] sm:$0xf]
    %v3005 = vld [vmem:[#allocation8 + $0x38] sm:$0xf]
    %v3006 = vld [vmem:[#allocation8 + $0x3c] sm:$0xf]
    %v3007 = vld [vmem:[#allocation8 + $0x40] sm:$0xf]
    %v3008 = vld [vmem:[#allocation8 + $0x44] sm:$0xf]
    %v3009 = vld [vmem:[#allocation8 + $0x48] sm:$0xf]
    %v3010 = vld [vmem:[#allocation8 + $0x4c] sm:$0xf]
    %v3011 = vld [vmem:[#allocation8 + $0x50] sm:$0xf]
    %v3012 = vld [vmem:[#allocation8 + $0x54] sm:$0xf]
    %v3013 = vld [vmem:[#allocation8 + $0x58] sm:$0xf]
    %v3014 = vld [vmem:[#allocation8 + $0x5c] sm:$0xf]
    %v3015 = vld [vmem:[#allocation8 + $0x60] sm:$0xf]
    %v3016 = vld [vmem:[#allocation8 + $0x64] sm:$0xf]
    %v3017 = vld [vmem:[#allocation8 + $0x68] sm:$0xf]
    %v3018 = vld [vmem:[#allocation8 + $0x6c] sm:$0xf]
    %v3019 = vld [vmem:[#allocation8 + $0x70] sm:$0xf]
    %v3020 = vld [vmem:[#allocation8 + $0x74] sm:$0xf]
    %v3021 = vld [vmem:[#allocation8 + $0x78] sm:$0xf]
    %v3022 = vld [vmem:[#allocation8 + $0x7c] sm:$0xf]
    %v3055 = vunpack.c.l.b16 %v2991
    %v3056 = vunpack.c.l.b16 %v2992
    %v3057 = vunpack.c.l.b16 %v2993
    %v3058 = vunpack.c.l.b16 %v2994
    %v3059 = vunpack.c.l.b16 %v2995
    %v3060 = vunpack.c.l.b16 %v2996
    %v3061 = vunpack.c.l.b16 %v2997
    %v3062 = vunpack.c.l.b16 %v2998
    %v3063 = vunpack.c.l.b16 %v2999
    %v3064 = vunpack.c.l.b16 %v3000
    %v3065 = vunpack.c.l.b16 %v3001
    %v3066 = vunpack.c.l.b16 %v3002
    %v3067 = vunpack.c.l.b16 %v3003
    %v3068 = vunpack.c.l.b16 %v3004
    %v3069 = vunpack.c.l.b16 %v3005
    %v3070 = vunpack.c.l.b16 %v3006
    %v3071 = vunpack.c.l.b16 %v3007
    %v3072 = vunpack.c.l.b16 %v3008
    %v3073 = vunpack.c.l.b16 %v3009
    %v3074 = vunpack.c.l.b16 %v3010
    %v3075 = vunpack.c.l.b16 %v3011
    %v3076 = vunpack.c.l.b16 %v3012
    %v3077 = vunpack.c.l.b16 %v3013
    %v3078 = vunpack.c.l.b16 %v3014
    %v3079 = vunpack.c.l.b16 %v3015
    %v3080 = vunpack.c.l.b16 %v3016
    %v3081 = vunpack.c.l.b16 %v3017
    %v3082 = vunpack.c.l.b16 %v3018
    %v3083 = vunpack.c.l.b16 %v3019
    %v3084 = vunpack.c.l.b16 %v3020
    %v3085 = vunpack.c.l.b16 %v3021
    %v3086 = vunpack.c.l.b16 %v3022
    %v3087 = vpack.c.b16 %v3056, %v3055
    %v3088 = vpack.c.b16 %v3058, %v3057
    %v3089 = vpack.c.b16 %v3060, %v3059
    %v3090 = vpack.c.b16 %v3062, %v3061
    %v3091 = vpack.c.b16 %v3064, %v3063
    %v3092 = vpack.c.b16 %v3066, %v3065
    %v3093 = vpack.c.b16 %v3068, %v3067
    %v3094 = vpack.c.b16 %v3070, %v3069
    %v3095 = vpack.c.b16 %v3072, %v3071
    %v3096 = vpack.c.b16 %v3074, %v3073
    %v3097 = vpack.c.b16 %v3076, %v3075
    %v3098 = vpack.c.b16 %v3078, %v3077
    %v3099 = vpack.c.b16 %v3080, %v3079
    %v3100 = vpack.c.b16 %v3082, %v3081
    %v3101 = vpack.c.b16 %v3084, %v3083
    %v3102 = vpack.c.b16 %v3086, %v3085
    %3119 = vmatpush.bf16.msra.mxu0 %v3094
    %3120 = vmatpush.bf16.msra.mxu0 %v3093
    %3121 = vmatpush.bf16.msra.mxu0 %v3092
    %3122 = vmatpush.bf16.msra.mxu0 %v3091
    %3123 = vmatpush.bf16.msra.mxu0 %v3090
    %3124 = vmatpush.bf16.msra.mxu0 %v3089
    %3125 = vmatpush.bf16.msra.mxu0 %v3088
    %3126 = vmatpush.bf16.msra.mxu0 %v3087
    %3127 = vmatmul.bf16.gmra.mxu0 %v2983
    %v3128 = vpop.f32.mrf.mxu0
    %v3129 = vadd.f32 0.0, %v3128
    %v3130 = vpop.f32.mrf.mxu0
    %v3131 = vadd.f32 0.0, %v3130
    %3132 = vmatmul.bf16.gmra.mxu0 %v2985
    %v3133 = vpop.f32.mrf.mxu0
    %v3134 = vadd.f32 0.0, %v3133
    %v3135 = vpop.f32.mrf.mxu0
    %v3136 = vadd.f32 0.0, %v3135
    %3137 = vmatmul.bf16.gmra.mxu0 %v2987
    %v3138 = vpop.f32.mrf.mxu0
    %v3139 = vadd.f32 0.0, %v3138
    %v3140 = vpop.f32.mrf.mxu0
    %v3141 = vadd.f32 0.0, %v3140
    %3142 = vmatmul.bf16.gmra.mxu0 %v2989
    %v3143 = vpop.f32.mrf.mxu0
    %v3144 = vadd.f32 0.0, %v3143
    %v3145 = vpop.f32.mrf.mxu0
    %v3146 = vadd.f32 0.0, %v3145
    %3147 = vdwg.mxu0
    %3148 = vmatpush.bf16.msra.mxu0 %v3102
    %3149 = vmatpush.bf16.msra.mxu0 %v3101
    %3150 = vmatpush.bf16.msra.mxu0 %v3100
    %3151 = vmatpush.bf16.msra.mxu0 %v3099
    %3152 = vmatpush.bf16.msra.mxu0 %v3098
    %3153 = vmatpush.bf16.msra.mxu0 %v3097
    %3154 = vmatpush.bf16.msra.mxu0 %v3096
    %3155 = vmatpush.bf16.msra.mxu0 %v3095
    %3156 = vmatmul.bf16.gmra.mxu0 %v2984
    %v3157 = vpop.f32.mrf.mxu0
    %v3158 = vadd.f32 %v3129, %v3157
    %v3159 = vpop.f32.mrf.mxu0
    %v3160 = vadd.f32 %v3131, %v3159
    %3161 = vmatmul.bf16.gmra.mxu0 %v2986
    %v3162 = vpop.f32.mrf.mxu0
    %v3163 = vadd.f32 %v3134, %v3162
    %v3164 = vpop.f32.mrf.mxu0
    %v3165 = vadd.f32 %v3136, %v3164
    %3166 = vmatmul.bf16.gmra.mxu0 %v2988
    %v3167 = vpop.f32.mrf.mxu0
    %v3168 = vadd.f32 %v3139, %v3167
    %v3169 = vpop.f32.mrf.mxu0
    %v3170 = vadd.f32 %v3141, %v3169
    %3171 = vmatmul.bf16.gmra.mxu0 %v2990
    %v3172 = vpop.f32.mrf.mxu0
    %v3173 = vadd.f32 %v3144, %v3172
    %v3174 = vpop.f32.mrf.mxu0
    %v3175 = vadd.f32 %v3146, %v3174
    %3176 = vdwg.mxu0
    %v3177 = vmax.f32 %v3158, 1.1920929e-07
    %v3178 = vmax.f32 %v3160, 1.1920929e-07
    %v3179 = vmax.f32 %v3163, 1.1920929e-07
    %v3180 = vmax.f32 %v3165, 1.1920929e-07
    %v3181 = vmax.f32 %v3168, 1.1920929e-07
    %v3182 = vmax.f32 %v3170, 1.1920929e-07
    %v3183 = vmax.f32 %v3173, 1.1920929e-07
    %v3184 = vmax.f32 %v3175, 1.1920929e-07
    %v3185 = vlog2.pop %v3177
    %v3186 = vmul.f32 %v3185, 0.6931472
    %v3187 = vlog2.pop %v3178
    %v3188 = vmul.f32 %v3187, 0.6931472
    %v3189 = vlog2.pop %v3179
    %v3190 = vmul.f32 %v3189, 0.6931472
    %v3191 = vlog2.pop %v3180
    %v3192 = vmul.f32 %v3191, 0.6931472
    %v3193 = vlog2.pop %v3181
    %v3194 = vmul.f32 %v3193, 0.6931472
    %v3195 = vlog2.pop %v3182
    %v3196 = vmul.f32 %v3195, 0.6931472
    %v3197 = vlog2.pop %v3183
    %v3198 = vmul.f32 %v3197, 0.6931472
    %v3199 = vlog2.pop %v3184
    %v3200 = vmul.f32 %v3199, 0.6931472
    %3201 = vst [vmem:[#allocation10] sm:$0xff] %v3186
    %3202 = vst [vmem:[#allocation10 + $0x8] sm:$0xff] %v3188
    %3203 = vst [vmem:[#allocation10 + $0x10] sm:$0xff] %v3190
    %3204 = vst [vmem:[#allocation10 + $0x18] sm:$0xff] %v3192
    %3205 = vst [vmem:[#allocation10 + $0x20] sm:$0xff] %v3194
    %3206 = vst [vmem:[#allocation10 + $0x28] sm:$0xff] %v3196
    %3207 = vst [vmem:[#allocation10 + $0x30] sm:$0xff] %v3198
    %3208 = vst [vmem:[#allocation10 + $0x38] sm:$0xff] %v3200
    // Predicated region
    $region34: #{tpu_custom_call.1} parent=1 // pred_check
      _
    $region35: #{tpu_custom_call.1} parent=1 // pred_check_branch
      %3210 = sbr.rel (0) target = $region37
    $region36: #{tpu_custom_call.1} parent=1 // pred_region
      %3212 = vsyncadd [#allocation4], 0
      %s3213 = sshll.u32 [#allocation10], 4
      %s3214 = int_to_ptr.vmem [resolvable:$true] %s3213
      %s3215 = sshll.u32 %s4, 4
      %s3216 = int_to_ptr.hbm [resolvable:$true] %s3215
      %3221 = dma.vmem_to_hbm [thread:$0]  %s3214, 1024, %s3216, [#allocation4], 128, 128, 8
    $region37: #{tpu_custom_call.1} parent=1 // pred_fallthru
      _
    // Predicated region
    $region38: #{tpu_custom_call.1} parent=1 // pred_check
      _
    $region39: #{tpu_custom_call.1} parent=1 // pred_check_branch
      %3223 = sbr.rel (0) target = $region41
    $region40: #{tpu_custom_call.1} parent=1 // pred_region
      %3225 = dma.done [#allocation4], 1024
    $region41: #{tpu_custom_call.1} parent=1 // pred_fallthru
      _
    %3226 = vsyncpa [#allocation3], 1
    %3227 = vsyncpa [#allocation6], 1
    %3228 = vsyncpa [#allocation9], 1
    %3229 = vsyncpa [#allocation4], 1

</llo_original>
